<compile_context>
chip_gen: v7x
topology: tpu7x:2x2x1
jax: 0.10.0
libtpu: 0.0.40
codegen_flags: <defaults>
</compile_context>

<pallas_src>
import jax
import jax.numpy as jnp
import numpy as np
from jax.experimental import pallas as pl
from jax.experimental.pallas import tpu as pltpu


# ---------------------------------------------------------------------------
# Pallas kernels
# ---------------------------------------------------------------------------
def _conv3x3s2_kernel(p00_ref, p00h_ref, p01_ref, p01h_ref, p10_ref, p11_ref,
                      w_ref, b_ref, o_ref):
    """Fused im2col + GEMM for Conv2d(C, C, k=3, s=2) on the padded image.

    Polyphase inputs (even/odd rows x even/odd cols of the padded image):
      p00_ref : (1, TH, Wo+1, C)  even rows [t*TH, (t+1)*TH), even cols
      p00h_ref: (1, 1,  Wo+1, C)  even row   (t+1)*TH        (halo for kh=2)
      p01_ref : (1, TH, Wo,   C)  even rows, odd cols
      p01h_ref: (1, 1,  Wo,   C)  halo row for the even/odd plane
      p10_ref : (1, TH, Wo+1, C)  odd rows, even cols
      p11_ref : (1, TH, Wo,   C)  odd rows, odd cols
      w_ref   : (3, 3, C, C)      (kh, kw, Cin, Cout) -- VMEM resident
      b_ref   : (1, C)
      o_ref   : (1, TH, Wo, C)
    """
    TH, Wo, C = o_ref.shape[1], o_ref.shape[2], o_ref.shape[3]

    # Append the single halo row so the kh == 2 taps stay in one slab.
    e0 = jnp.concatenate([p00_ref[0], p00h_ref[0]], axis=0)   # (TH+1, Wo+1, C)
    e1 = jnp.concatenate([p01_ref[0], p01h_ref[0]], axis=0)   # (TH+1, Wo,   C)
    o0 = p10_ref[0]                                           # (TH,   Wo+1, C)
    o1 = p11_ref[0]                                           # (TH,   Wo,   C)

    # (kh, kw) -> (polyphase plane, row offset, col offset); tap (kh, kw) of
    # output (i, j) reads padded pixel (2i+kh, 2j+kw).
    taps = ((e0, 0, 0), (e1, 0, 0), (e0, 0, 1),
            (o0, 0, 0), (o1, 0, 0), (o0, 0, 1),
            (e0, 1, 0), (e1, 1, 0), (e0, 1, 1))

    # Bias folded into the accumulator init: one broadcast per tile, full-K
    # accumulation in f32, a single store at the end.
    acc = jnp.broadcast_to(b_ref[...].astype(jnp.float32), (TH * Wo, C))
    for idx, (src, dr, dc) in enumerate(taps):
        kh, kw = idx // 3, idx % 3
        patch = src[dr:dr + TH, dc:dc + Wo, :].reshape(TH * Wo, C)
        acc = acc + jnp.dot(patch, w_ref[kh, kw],
                            preferred_element_type=jnp.float32)

    o_ref[0] = acc.reshape(TH, Wo, C).astype(o_ref.dtype)


def _avgpool2x2_kernel(p00_ref, p01_ref, p10_ref, p11_ref, o_ref):
    # Each plane block: (1, TP, Wo, C); output block: (1, TP, Wo, C).
    s = (p00_ref[0].astype(jnp.float32) + p01_ref[0].astype(jnp.float32) +
         p10_ref[0].astype(jnp.float32) + p11_ref[0].astype(jnp.float32))
    o_ref[0] = (s * 0.25).astype(o_ref.dtype)


# ---------------------------------------------------------------------------
# Tile selection
# ---------------------------------------------------------------------------
def _pick_row_tile(Ho, Wo, C, itemsize=4, target_m=1024,
                   vmem_budget=8 * 1024 * 1024):
    """Largest divisor of Ho such that the implicit-GEMM M dim (TH*Wo) is
    ~target_m and the double-buffered blocks stay comfortably inside scoped
    VMEM on all of v5e (16 MiB default) / v6e / v7x (32 MiB default)."""
    bytes_per_row = itemsize * C * (12 * Wo + 8)   # dbl-buf inputs + out + acc
    cap = min(Ho,
              max(1, target_m // max(Wo, 1)),
              max(1, vmem_budget // max(bytes_per_row, 1)))
    if cap >= Ho:
        return Ho
    best = 1
    for th in range(1, cap + 1):
        if Ho % th == 0:
            best = th
    return best


# ---------------------------------------------------------------------------
# Wrapper (layout glue only: transpose, pad, polyphase views, param reshape)
# ---------------------------------------------------------------------------
def downsample(x_nchw, weight=None, bias=None, *, with_conv=True,
               row_tile=None, use_bf16=False):
    N, C, H, W = x_nchw.shape
    x = jnp.transpose(x_nchw, (0, 2, 3, 1))            # NCHW -> NHWC (glue)
    cparams = lambda: pltpu.CompilerParams(
        dimension_semantics=("parallel", "parallel"),
        vmem_limit_bytes=32 * 1024 * 1024)

    if with_conv:
        # F.pad(x, (0,1,0,1)): zero-pad right / bottom by 1.
        x_pad = jnp.pad(x, ((0, 0), (0, 1), (0, 1), (0, 0)))
        Hp, Wp = H + 1, W + 1
        Ho = (Hp - 3) // 2 + 1
        Wo = (Wp - 3) // 2 + 1

        # Polyphase split of the padded image (exact ~1x repartition; replaces
        # the 2.25x im2col patches array; fused by XLA into the transpose/pad).
        p00 = x_pad[:, 0:2 * Ho + 1:2, 0:2 * Wo + 1:2, :]   # (N, Ho+1, Wo+1, C)
        p01 = x_pad[:, 0:2 * Ho + 1:2, 1:2 * Wo + 1:2, :]   # (N, Ho+1, Wo,   C)
        p10 = x_pad[:, 1:2 * Ho + 1:2, 0:2 * Wo + 1:2, :]   # (N, Ho,   Wo+1, C)
        p11 = x_pad[:, 1:2 * Ho + 1:2, 1:2 * Wo + 1:2, :]   # (N, Ho,   Wo,   C)

        # torch weight (Cout, Cin, kh, kw) -> (kh, kw, Cin, Cout)
        w4 = jnp.transpose(weight, (2, 3, 1, 0))
        b_mat = bias.reshape(1, C)

        if use_bf16:   # optional MXU speedup; accumulation stays f32
            p00, p01, p10, p11 = (t.astype(jnp.bfloat16)
                                  for t in (p00, p01, p10, p11))
            w4 = w4.astype(jnp.bfloat16)

        TH = row_tile if row_tile is not None else _pick_row_tile(Ho, Wo, C)
        assert Ho % TH == 0, "row tile must divide the output height"
        nT = Ho // TH

        main = lambda n, t: (n, t, 0, 0)
        halo = lambda n, t: (n, (t + 1) * TH, 0, 0)      # single extra even row

        out = pl.pallas_call(
            _conv3x3s2_kernel,
            out_shape=jax.ShapeDtypeStruct((N, Ho, Wo, C), x.dtype),
            grid=(N, nT),
            in_specs=[
                pl.BlockSpec((1, TH, Wo + 1, C), main),
                pl.BlockSpec((1, 1,  Wo + 1, C), halo),
                pl.BlockSpec((1, TH, Wo,     C), main),
                pl.BlockSpec((1, 1,  Wo,     C), halo),
                pl.BlockSpec((1, TH, Wo + 1, C), main),
                pl.BlockSpec((1, TH, Wo,     C), main),
                # constant block index -> weight / bias stay VMEM-resident
                pl.BlockSpec((3, 3, C, C), lambda n, t: (0, 0, 0, 0)),
                pl.BlockSpec((1, C),       lambda n, t: (0, 0)),
            ],
            out_specs=pl.BlockSpec((1, TH, Wo, C), main),
            compiler_params=cparams(),
        )(p00, p00, p01, p01, p10, p11, w4, b_mat)
    else:
        Ho, Wo = H // 2, W // 2
        # 2x2 polyphase views (exact repartition of x; no stacked phases array).
        p00 = x[:, 0:2 * Ho:2, 0:2 * Wo:2, :]
        p01 = x[:, 0:2 * Ho:2, 1:2 * Wo:2, :]
        p10 = x[:, 1:2 * Ho:2, 0:2 * Wo:2, :]
        p11 = x[:, 1:2 * Ho:2, 1:2 * Wo:2, :]

        TP = row_tile if row_tile is not None else _pick_row_tile(Ho, Wo, C)
        assert Ho % TP == 0, "row tile must divide the output height"
        nT = Ho // TP
        spec = pl.BlockSpec((1, TP, Wo, C), lambda n, t: (n, t, 0, 0))

        out = pl.pallas_call(
            _avgpool2x2_kernel,
            out_shape=jax.ShapeDtypeStruct((N, Ho, Wo, C), x.dtype),
            grid=(N, nT),
            in_specs=[spec, spec, spec, spec],
            out_specs=spec,
            compiler_params=cparams(),
        )(p00, p01, p10, p11)

    return jnp.transpose(out, (0, 3, 1, 2))              # NHWC -> NCHW


# ---------------------------------------------------------------------------
# Main
# ---------------------------------------------------------------------------
if __name__ == "__main__":
    def conv_ref(x, w, b):
        y = jax.lax.conv_general_dilated(
            x, w, window_strides=(2, 2), padding=((0, 1), (0, 1)),
            dimension_numbers=("NCHW", "OIHW", "NCHW"))
        return y + b[None, :, None, None]

    def pool_ref(x):
        n, c, h, w = x.shape
        return x.reshape(n, c, h // 2, 2, w // 2, 2).mean(axis=(3, 5))

    # --- case 1: module-spec toy shapes (single row tile per image) ---------
    k_x, k_w, k_b = jax.random.split(jax.random.PRNGKey(0), 3)
    N, C, H, W = 2, 4, 16, 16
    x = jax.random.normal(k_x, (N, C, H, W), jnp.float32)
    w = 0.1 * jax.random.normal(k_w, (C, C, 3, 3), jnp.float32)   # OIHW
    b = 0.1 * jax.random.normal(k_b, (C,), jnp.float32)

    y_conv = jax.block_until_ready(downsample(x, w, b, with_conv=True))
    assert y_conv.shape == (N, C, (H + 1 - 3) // 2 + 1, (W + 1 - 3) // 2 + 1)
    np.testing.assert_allclose(np.asarray(y_conv), np.asarray(conv_ref(x, w, b)),
                               atol=1e-4, rtol=1e-4)

    y_pool = jax.block_until_ready(downsample(x, with_conv=False))
    np.testing.assert_allclose(np.asarray(y_pool), np.asarray(pool_ref(x)),
                               atol=1e-5, rtol=1e-5)

    # --- case 2: exercise the multi-tile grid + halo path --------------------
    k_x2, k_w2, k_b2 = jax.random.split(jax.random.PRNGKey(1), 3)
    N2, C2, H2, W2 = 2, 8, 32, 32
    x2 = jax.random.normal(k_x2, (N2, C2, H2, W2), jnp.float32)
    w2 = 0.1 * jax.random.normal(k_w2, (C2, C2, 3, 3), jnp.float32)
    b2 = 0.1 * jax.random.normal(k_b2, (C2,), jnp.float32)

    y2 = jax.block_until_ready(downsample(x2, w2, b2, with_conv=True, row_tile=8))
    np.testing.assert_allclose(np.asarray(y2), np.asarray(conv_ref(x2, w2, b2)),
                               atol=1e-4, rtol=1e-4)

    y2p = jax.block_until_ready(downsample(x2, with_conv=False, row_tile=8))
    np.testing.assert_allclose(np.asarray(y2p), np.asarray(pool_ref(x2)),
                               atol=1e-5, rtol=1e-5)

    print("KERNEL_OK")
</pallas_src>

<mosaic_0001>
module attributes {stable_mosaic.version = 11 : i64} {
  func.func @_conv3x3s2_kernel(%arg0: i32, %arg1: i32, %arg2: memref<1x8x9x4xf32, #tpu.memory_space<vmem>>, %arg3: memref<1x1x9x4xf32, #tpu.memory_space<vmem>>, %arg4: memref<1x8x8x4xf32, #tpu.memory_space<vmem>>, %arg5: memref<1x1x8x4xf32, #tpu.memory_space<vmem>>, %arg6: memref<1x8x9x4xf32, #tpu.memory_space<vmem>>, %arg7: memref<1x8x8x4xf32, #tpu.memory_space<vmem>>, %arg8: memref<3x3x4x4xf32, #tpu.memory_space<vmem>>, %arg9: memref<1x4xf32, #tpu.memory_space<vmem>>, %arg10: memref<1x8x8x4xf32, #tpu.memory_space<vmem>>) attributes {dimension_semantics = [#tpu.dimension_semantics<parallel>, #tpu.dimension_semantics<parallel>], iteration_bounds = array<i64: 2, 1>, scalar_prefetch = 0 : i64, scratch_operands = 0 : i64, tpu.core_type = #tpu.core_type<tc>, window_params = [{transform_indices = @transform_0, window_bounds = array<i64: 1, 8, 9, 4>}, {transform_indices = @transform_1, window_bounds = array<i64: 1, 1, 9, 4>}, {transform_indices = @transform_2, window_bounds = array<i64: 1, 8, 8, 4>}, {transform_indices = @transform_3, window_bounds = array<i64: 1, 1, 8, 4>}, {transform_indices = @transform_4, window_bounds = array<i64: 1, 8, 9, 4>}, {transform_indices = @transform_5, window_bounds = array<i64: 1, 8, 8, 4>}, {pipeline_mode = #tpu.pipeline_mode<synchronous>, transform_indices = @transform_6, window_bounds = array<i64: 3, 3, 4, 4>}, {pipeline_mode = #tpu.pipeline_mode<synchronous>, transform_indices = @transform_7, window_bounds = array<i64: 1, 4>}, {transform_indices = @transform_8, window_bounds = array<i64: 1, 8, 8, 4>}]} {
    %c0 = arith.constant 0 : index
    %c0_0 = arith.constant 0 : index
    %c0_1 = arith.constant 0 : index
    %c0_2 = arith.constant 0 : index
    %0 = vector.load %arg2[%c0, %c0_0, %c0_1, %c0_2] : memref<1x8x9x4xf32, #tpu.memory_space<vmem>>, vector<1x8x9x4xf32>
    %1 = vector.shape_cast %0 : vector<1x8x9x4xf32> to vector<8x9x4xf32>
    %c0_3 = arith.constant 0 : index
    %c0_4 = arith.constant 0 : index
    %c0_5 = arith.constant 0 : index
    %c0_6 = arith.constant 0 : index
    %2 = vector.load %arg3[%c0_3, %c0_4, %c0_5, %c0_6] : memref<1x1x9x4xf32, #tpu.memory_space<vmem>>, vector<1x1x9x4xf32>
    %3 = vector.shape_cast %2 : vector<1x1x9x4xf32> to vector<1x9x4xf32>
    %4 = tpu.concatenate %1, %3 in 0 : vector<8x9x4xf32>, vector<1x9x4xf32> -> vector<9x9x4xf32>
    %c0_7 = arith.constant 0 : index
    %c0_8 = arith.constant 0 : index
    %c0_9 = arith.constant 0 : index
    %c0_10 = arith.constant 0 : index
    %5 = vector.load %arg4[%c0_7, %c0_8, %c0_9, %c0_10] : memref<1x8x8x4xf32, #tpu.memory_space<vmem>>, vector<1x8x8x4xf32>
    %6 = vector.shape_cast %5 : vector<1x8x8x4xf32> to vector<8x8x4xf32>
    %c0_11 = arith.constant 0 : index
    %c0_12 = arith.constant 0 : index
    %c0_13 = arith.constant 0 : index
    %c0_14 = arith.constant 0 : index
    %7 = vector.load %arg5[%c0_11, %c0_12, %c0_13, %c0_14] : memref<1x1x8x4xf32, #tpu.memory_space<vmem>>, vector<1x1x8x4xf32>
    %8 = vector.shape_cast %7 : vector<1x1x8x4xf32> to vector<1x8x4xf32>
    %9 = tpu.concatenate %6, %8 in 0 : vector<8x8x4xf32>, vector<1x8x4xf32> -> vector<9x8x4xf32>
    %c0_15 = arith.constant 0 : index
    %c0_16 = arith.constant 0 : index
    %c0_17 = arith.constant 0 : index
    %c0_18 = arith.constant 0 : index
    %10 = vector.load %arg6[%c0_15, %c0_16, %c0_17, %c0_18] : memref<1x8x9x4xf32, #tpu.memory_space<vmem>>, vector<1x8x9x4xf32>
    %11 = vector.shape_cast %10 : vector<1x8x9x4xf32> to vector<8x9x4xf32>
    %c0_19 = arith.constant 0 : index
    %c0_20 = arith.constant 0 : index
    %c0_21 = arith.constant 0 : index
    %c0_22 = arith.constant 0 : index
    %12 = vector.load %arg7[%c0_19, %c0_20, %c0_21, %c0_22] : memref<1x8x8x4xf32, #tpu.memory_space<vmem>>, vector<1x8x8x4xf32>
    %13 = vector.shape_cast %12 : vector<1x8x8x4xf32> to vector<8x8x4xf32>
    %c0_23 = arith.constant 0 : index
    %c0_24 = arith.constant 0 : index
    %14 = vector.load %arg9[%c0_23, %c0_24] : memref<1x4xf32, #tpu.memory_space<vmem>>, vector<1x4xf32>
    %15 = vector.shape_cast %14 : vector<1x4xf32> to vector<1x4xf32>
    %16 = vector.broadcast %15 : vector<1x4xf32> to vector<64x4xf32>
    %17 = vector.extract_strided_slice %4 {offsets = [0, 0, 0], sizes = [8, 8, 4], strides = [1, 1, 1]} : vector<9x9x4xf32> to vector<8x8x4xf32>
    %18 = vector.shape_cast %17 : vector<8x8x4xf32> to vector<64x4xf32>
    %c0_25 = arith.constant 0 : index
    %c0_26 = arith.constant 0 : index
    %c0_27 = arith.constant 0 : index
    %c0_28 = arith.constant 0 : index
    %19 = vector.load %arg8[%c0_25, %c0_26, %c0_27, %c0_28] : memref<3x3x4x4xf32, #tpu.memory_space<vmem>>, vector<1x1x4x4xf32>
    %20 = vector.shape_cast %19 : vector<1x1x4x4xf32> to vector<4x4xf32>
    %cst = arith.constant dense<0.000000e+00> : vector<64x4xf32>
    %21 = tpu.matmul %18, %20, %cst {dimension_numbers = #tpu.dot_dimension_numbers<[1], [0], [0], [1], [0, 0, 1, 1], [], []>} : vector<64x4xf32>, vector<4x4xf32>, vector<64x4xf32> -> vector<64x4xf32>
    %22 = arith.addf %16, %21 : vector<64x4xf32>
    %23 = vector.extract_strided_slice %9 {offsets = [0, 0, 0], sizes = [8, 8, 4], strides = [1, 1, 1]} : vector<9x8x4xf32> to vector<8x8x4xf32>
    %24 = vector.shape_cast %23 : vector<8x8x4xf32> to vector<64x4xf32>
    %c0_29 = arith.constant 0 : index
    %c1 = arith.constant 1 : index
    %c0_30 = arith.constant 0 : index
    %c0_31 = arith.constant 0 : index
    %25 = vector.load %arg8[%c0_29, %c1, %c0_30, %c0_31] : memref<3x3x4x4xf32, #tpu.memory_space<vmem>>, vector<1x1x4x4xf32>
    %26 = vector.shape_cast %25 : vector<1x1x4x4xf32> to vector<4x4xf32>
    %cst_32 = arith.constant dense<0.000000e+00> : vector<64x4xf32>
    %27 = tpu.matmul %24, %26, %cst_32 {dimension_numbers = #tpu.dot_dimension_numbers<[1], [0], [0], [1], [0, 0, 1, 1], [], []>} : vector<64x4xf32>, vector<4x4xf32>, vector<64x4xf32> -> vector<64x4xf32>
    %28 = arith.addf %22, %27 : vector<64x4xf32>
    %29 = vector.extract_strided_slice %4 {offsets = [0, 1, 0], sizes = [8, 8, 4], strides = [1, 1, 1]} : vector<9x9x4xf32> to vector<8x8x4xf32>
    %30 = vector.shape_cast %29 : vector<8x8x4xf32> to vector<64x4xf32>
    %c0_33 = arith.constant 0 : index
    %c2 = arith.constant 2 : index
    %c0_34 = arith.constant 0 : index
    %c0_35 = arith.constant 0 : index
    %31 = vector.load %arg8[%c0_33, %c2, %c0_34, %c0_35] : memref<3x3x4x4xf32, #tpu.memory_space<vmem>>, vector<1x1x4x4xf32>
    %32 = vector.shape_cast %31 : vector<1x1x4x4xf32> to vector<4x4xf32>
    %cst_36 = arith.constant dense<0.000000e+00> : vector<64x4xf32>
    %33 = tpu.matmul %30, %32, %cst_36 {dimension_numbers = #tpu.dot_dimension_numbers<[1], [0], [0], [1], [0, 0, 1, 1], [], []>} : vector<64x4xf32>, vector<4x4xf32>, vector<64x4xf32> -> vector<64x4xf32>
    %34 = arith.addf %28, %33 : vector<64x4xf32>
    %35 = vector.extract_strided_slice %11 {offsets = [0, 0, 0], sizes = [8, 8, 4], strides = [1, 1, 1]} : vector<8x9x4xf32> to vector<8x8x4xf32>
    %36 = vector.shape_cast %35 : vector<8x8x4xf32> to vector<64x4xf32>
    %c1_37 = arith.constant 1 : index
    %c0_38 = arith.constant 0 : index
    %c0_39 = arith.constant 0 : index
    %c0_40 = arith.constant 0 : index
    %37 = vector.load %arg8[%c1_37, %c0_38, %c0_39, %c0_40] : memref<3x3x4x4xf32, #tpu.memory_space<vmem>>, vector<1x1x4x4xf32>
    %38 = vector.shape_cast %37 : vector<1x1x4x4xf32> to vector<4x4xf32>
    %cst_41 = arith.constant dense<0.000000e+00> : vector<64x4xf32>
    %39 = tpu.matmul %36, %38, %cst_41 {dimension_numbers = #tpu.dot_dimension_numbers<[1], [0], [0], [1], [0, 0, 1, 1], [], []>} : vector<64x4xf32>, vector<4x4xf32>, vector<64x4xf32> -> vector<64x4xf32>
    %40 = arith.addf %34, %39 : vector<64x4xf32>
    %41 = vector.shape_cast %13 : vector<8x8x4xf32> to vector<64x4xf32>
    %c1_42 = arith.constant 1 : index
    %c1_43 = arith.constant 1 : index
    %c0_44 = arith.constant 0 : index
    %c0_45 = arith.constant 0 : index
    %42 = vector.load %arg8[%c1_42, %c1_43, %c0_44, %c0_45] : memref<3x3x4x4xf32, #tpu.memory_space<vmem>>, vector<1x1x4x4xf32>
    %43 = vector.shape_cast %42 : vector<1x1x4x4xf32> to vector<4x4xf32>
    %cst_46 = arith.constant dense<0.000000e+00> : vector<64x4xf32>
    %44 = tpu.matmul %41, %43, %cst_46 {dimension_numbers = #tpu.dot_dimension_numbers<[1], [0], [0], [1], [0, 0, 1, 1], [], []>} : vector<64x4xf32>, vector<4x4xf32>, vector<64x4xf32> -> vector<64x4xf32>
    %45 = arith.addf %40, %44 : vector<64x4xf32>
    %46 = vector.extract_strided_slice %11 {offsets = [0, 1, 0], sizes = [8, 8, 4], strides = [1, 1, 1]} : vector<8x9x4xf32> to vector<8x8x4xf32>
    %47 = vector.shape_cast %46 : vector<8x8x4xf32> to vector<64x4xf32>
    %c1_47 = arith.constant 1 : index
    %c2_48 = arith.constant 2 : index
    %c0_49 = arith.constant 0 : index
    %c0_50 = arith.constant 0 : index
    %48 = vector.load %arg8[%c1_47, %c2_48, %c0_49, %c0_50] : memref<3x3x4x4xf32, #tpu.memory_space<vmem>>, vector<1x1x4x4xf32>
    %49 = vector.shape_cast %48 : vector<1x1x4x4xf32> to vector<4x4xf32>
    %cst_51 = arith.constant dense<0.000000e+00> : vector<64x4xf32>
    %50 = tpu.matmul %47, %49, %cst_51 {dimension_numbers = #tpu.dot_dimension_numbers<[1], [0], [0], [1], [0, 0, 1, 1], [], []>} : vector<64x4xf32>, vector<4x4xf32>, vector<64x4xf32> -> vector<64x4xf32>
    %51 = arith.addf %45, %50 : vector<64x4xf32>
    %52 = vector.extract_strided_slice %4 {offsets = [1, 0, 0], sizes = [8, 8, 4], strides = [1, 1, 1]} : vector<9x9x4xf32> to vector<8x8x4xf32>
    %53 = vector.shape_cast %52 : vector<8x8x4xf32> to vector<64x4xf32>
    %c2_52 = arith.constant 2 : index
    %c0_53 = arith.constant 0 : index
    %c0_54 = arith.constant 0 : index
    %c0_55 = arith.constant 0 : index
    %54 = vector.load %arg8[%c2_52, %c0_53, %c0_54, %c0_55] : memref<3x3x4x4xf32, #tpu.memory_space<vmem>>, vector<1x1x4x4xf32>
    %55 = vector.shape_cast %54 : vector<1x1x4x4xf32> to vector<4x4xf32>
    %cst_56 = arith.constant dense<0.000000e+00> : vector<64x4xf32>
    %56 = tpu.matmul %53, %55, %cst_56 {dimension_numbers = #tpu.dot_dimension_numbers<[1], [0], [0], [1], [0, 0, 1, 1], [], []>} : vector<64x4xf32>, vector<4x4xf32>, vector<64x4xf32> -> vector<64x4xf32>
    %57 = arith.addf %51, %56 : vector<64x4xf32>
    %58 = vector.extract_strided_slice %9 {offsets = [1, 0, 0], sizes = [8, 8, 4], strides = [1, 1, 1]} : vector<9x8x4xf32> to vector<8x8x4xf32>
    %59 = vector.shape_cast %58 : vector<8x8x4xf32> to vector<64x4xf32>
    %c2_57 = arith.constant 2 : index
    %c1_58 = arith.constant 1 : index
    %c0_59 = arith.constant 0 : index
    %c0_60 = arith.constant 0 : index
    %60 = vector.load %arg8[%c2_57, %c1_58, %c0_59, %c0_60] : memref<3x3x4x4xf32, #tpu.memory_space<vmem>>, vector<1x1x4x4xf32>
    %61 = vector.shape_cast %60 : vector<1x1x4x4xf32> to vector<4x4xf32>
    %cst_61 = arith.constant dense<0.000000e+00> : vector<64x4xf32>
    %62 = tpu.matmul %59, %61, %cst_61 {dimension_numbers = #tpu.dot_dimension_numbers<[1], [0], [0], [1], [0, 0, 1, 1], [], []>} : vector<64x4xf32>, vector<4x4xf32>, vector<64x4xf32> -> vector<64x4xf32>
    %63 = arith.addf %57, %62 : vector<64x4xf32>
    %64 = vector.extract_strided_slice %4 {offsets = [1, 1, 0], sizes = [8, 8, 4], strides = [1, 1, 1]} : vector<9x9x4xf32> to vector<8x8x4xf32>
    %65 = vector.shape_cast %64 : vector<8x8x4xf32> to vector<64x4xf32>
    %c2_62 = arith.constant 2 : index
    %c2_63 = arith.constant 2 : index
    %c0_64 = arith.constant 0 : index
    %c0_65 = arith.constant 0 : index
    %66 = vector.load %arg8[%c2_62, %c2_63, %c0_64, %c0_65] : memref<3x3x4x4xf32, #tpu.memory_space<vmem>>, vector<1x1x4x4xf32>
    %67 = vector.shape_cast %66 : vector<1x1x4x4xf32> to vector<4x4xf32>
    %cst_66 = arith.constant dense<0.000000e+00> : vector<64x4xf32>
    %68 = tpu.matmul %65, %67, %cst_66 {dimension_numbers = #tpu.dot_dimension_numbers<[1], [0], [0], [1], [0, 0, 1, 1], [], []>} : vector<64x4xf32>, vector<4x4xf32>, vector<64x4xf32> -> vector<64x4xf32>
    %69 = arith.addf %63, %68 : vector<64x4xf32>
    %70 = vector.shape_cast %69 : vector<64x4xf32> to vector<8x8x4xf32>
    %c0_67 = arith.constant 0 : index
    %c0_68 = arith.constant 0 : index
    %c0_69 = arith.constant 0 : index
    %c0_70 = arith.constant 0 : index
    %71 = vector.load %arg10[%c0_67, %c0_68, %c0_69, %c0_70] : memref<1x8x8x4xf32, #tpu.memory_space<vmem>>, vector<1x8x8x4xf32>
    %72 = vector.shape_cast %71 : vector<1x8x8x4xf32> to vector<8x8x4xf32>
    %73 = vector.shape_cast %70 : vector<8x8x4xf32> to vector<1x8x8x4xf32>
    tpu.vector_store %arg10[%c0_67, %c0_68, %c0_69, %c0_70], %73 {strides = array<i32>} : memref<1x8x8x4xf32, #tpu.memory_space<vmem>>, vector<1x8x8x4xf32>,
    return
  }
  func.func @transform_0(%arg0: i32, %arg1: i32) -> (i32, i32, i32, i32) {
    %c0_i32 = arith.constant 0 : i32
    %c0_i32_0 = arith.constant 0 : i32
    %c0_i32_1 = arith.constant 0 : i32
    return %arg0, %arg1, %c0_i32, %c0_i32_0 : i32, i32, i32, i32
  }
  func.func @transform_1(%arg0: i32, %arg1: i32) -> (i32, i32, i32, i32) {
    %c1_i32 = arith.constant 1 : i32
    %0 = arith.addi %arg1, %c1_i32 : i32
    %c8_i32 = arith.constant 8 : i32
    %1 = arith.muli %0, %c8_i32 : i32
    %c0_i32 = arith.constant 0 : i32
    %c0_i32_0 = arith.constant 0 : i32
    %c0_i32_1 = arith.constant 0 : i32
    return %arg0, %1, %c0_i32, %c0_i32_0 : i32, i32, i32, i32
  }
  func.func @transform_2(%arg0: i32, %arg1: i32) -> (i32, i32, i32, i32) {
    %c0_i32 = arith.constant 0 : i32
    %c0_i32_0 = arith.constant 0 : i32
    %c0_i32_1 = arith.constant 0 : i32
    return %arg0, %arg1, %c0_i32, %c0_i32_0 : i32, i32, i32, i32
  }
  func.func @transform_3(%arg0: i32, %arg1: i32) -> (i32, i32, i32, i32) {
    %c1_i32 = arith.constant 1 : i32
    %0 = arith.addi %arg1, %c1_i32 : i32
    %c8_i32 = arith.constant 8 : i32
    %1 = arith.muli %0, %c8_i32 : i32
    %c0_i32 = arith.constant 0 : i32
    %c0_i32_0 = arith.constant 0 : i32
    %c0_i32_1 = arith.constant 0 : i32
    return %arg0, %1, %c0_i32, %c0_i32_0 : i32, i32, i32, i32
  }
  func.func @transform_4(%arg0: i32, %arg1: i32) -> (i32, i32, i32, i32) {
    %c0_i32 = arith.constant 0 : i32
    %c0_i32_0 = arith.constant 0 : i32
    %c0_i32_1 = arith.constant 0 : i32
    return %arg0, %arg1, %c0_i32, %c0_i32_0 : i32, i32, i32, i32
  }
  func.func @transform_5(%arg0: i32, %arg1: i32) -> (i32, i32, i32, i32) {
    %c0_i32 = arith.constant 0 : i32
    %c0_i32_0 = arith.constant 0 : i32
    %c0_i32_1 = arith.constant 0 : i32
    return %arg0, %arg1, %c0_i32, %c0_i32_0 : i32, i32, i32, i32
  }
  func.func @transform_6(%arg0: i32, %arg1: i32) -> (i32, i32, i32, i32) {
    %c0_i32 = arith.constant 0 : i32
    %c0_i32_0 = arith.constant 0 : i32
    %c0_i32_1 = arith.constant 0 : i32
    %c0_i32_2 = arith.constant 0 : i32
    %c0_i32_3 = arith.constant 0 : i32
    return %c0_i32, %c0_i32_0, %c0_i32_1, %c0_i32_2 : i32, i32, i32, i32
  }
  func.func @transform_7(%arg0: i32, %arg1: i32) -> (i32, i32) {
    %c0_i32 = arith.constant 0 : i32
    %c0_i32_0 = arith.constant 0 : i32
    %c0_i32_1 = arith.constant 0 : i32
    return %c0_i32, %c0_i32_0 : i32, i32
  }
  func.func @transform_8(%arg0: i32, %arg1: i32) -> (i32, i32, i32, i32) {
    %c0_i32 = arith.constant 0 : i32
    %c0_i32_0 = arith.constant 0 : i32
    %c0_i32_1 = arith.constant 0 : i32
    return %arg0, %arg1, %c0_i32, %c0_i32_0 : i32, i32, i32, i32
  }
}

</mosaic_0001>

<llo_original>
// kernel: tpu_custom_call.1
$region0: #{tpu_custom_call.1}
  #allocation0 [shape = 'u32[]', space=smem, size = 0x4, offset = 0x4, fixed_abs, tag = 'smem constant byte address 0x4 - core index']
  #allocation1 [shape = 'u32[144,128]{1,0:T(1,128)}', space=vmem, size = 0x12000, scoped, tag = 'internal scratch']
  %s0 = inlined_call_operand.vmem [shape: f32[2,9,9,4], index: 0, kind: input, shape index: {}]
  %s1 = inlined_call_operand.vmem [shape: f32[2,9,9,4], index: 1, kind: input, shape index: {}]
  %s2 = inlined_call_operand.vmem [shape: f32[2,9,8,4], index: 2, kind: input, shape index: {}]
  %s3 = inlined_call_operand.vmem [shape: f32[2,9,8,4], index: 3, kind: input, shape index: {}]
  %s4 = inlined_call_operand.vmem [shape: f32[2,8,9,4], index: 4, kind: input, shape index: {}]
  %s5 = inlined_call_operand.vmem [shape: f32[2,8,8,4], index: 5, kind: input, shape index: {}]
  %s6 = inlined_call_operand.vmem [shape: f32[3,3,4,4], index: 6, kind: input, shape index: {}]
  %s7 = inlined_call_operand.vmem [shape: f32[1,4], index: 7, kind: input, shape index: {}]
  %s8 = inlined_call_operand.vmem [shape: f32[2,8,8,4], index: 8, kind: output, shape index: {}]
  %s9 = sld [smem:[#allocation0]]
  $region65: #{tpu_custom_call.1} parent=0
    _
  %s11 = ssub.s32 1, %s9
  %s12 = scalar_select 0, %s11, %s9
  loop: start=0, step=1, limit=4
  $region2: #{tpu_custom_call.1} parent=0 // loop_pre_header
    _
  $region3: #{tpu_custom_call.1} parent=0 // loop_header
    %s14 = sphi 0, %s18
    %p15 = scmp.ge.s32.totalorder %s14, 4
    %s21 = sphi 0, %s33
    %s22 = sphi 0, %s29
    %s23 = sphi 0, %s21
    %s24 = sphi 0, %s22
    %s25 = sphi 0, %s23
    %s26 = sphi 0, %s24
    %s38 = sphi 0, %s40
    %s41 = sphi 0, %s38
    %s42 = sphi 0, %s41
    %s58 = sphi 0, %s42
    %s70 = sphi 0, %s72
    %s73 = sphi 0, %s70
    %s74 = sphi 0, %s73
    %s90 = sphi 0, %s74
    %s98 = sphi 0, %s100
    %s101 = sphi 0, %s98
    %s102 = sphi 0, %s101
    %s118 = sphi 0, %s102
    %s130 = sphi 0, %s132
    %s133 = sphi 0, %s130
    %s134 = sphi 0, %s133
    %s150 = sphi 0, %s134
    %s158 = sphi 0, %s160
    %s161 = sphi 0, %s158
    %s162 = sphi 0, %s161
    %s178 = sphi 0, %s162
    %s186 = sphi 0, %s188
    %s189 = sphi 0, %s186
    %s190 = sphi 0, %s189
    %s206 = sphi 0, %s190
    %s210 = sphi 0, %s210
    %s212 = sphi 0, %s210
    %s213 = sphi 0, %s212
    %s227 = sphi 0, %s213
    %s231 = sphi 0, %s231
    %s233 = sphi 0, %s231
    %s234 = sphi 0, %s233
    %s248 = sphi 0, %s234
    %s256 = sphi 0, %s258
    %s259 = sphi 0, %s256
    %s260 = sphi 0, %s259
    %s276 = sphi 0, %s260
  $region4: #{tpu_custom_call.1} parent=0 // loop_header_branch
    %17 = sbr.rel (%p15) target = $region8
  $region5: #{tpu_custom_call.1} parent=0 // loop_body
    %s19 = ssub.s32 %s14, 1
    %s20 = ssub.s32 %s14, 2
    %s27 = sadd.s32 1, %s22
    %p28 = scmp.ge.s32.totalorder %s27, 1
    %s29 = scalar_select %p28, 0, %s27
    %s30 = sadd.s32 1, %s21
    %s31 = scalar_select %p28, %s30, %s21
    %p32 = scmp.ge.s32.totalorder %s31, 2
    %s33 = scalar_select %p32, 0, %s31
    %s34 = ssub.s32 %s21, %s33
    %s35 = ssub.s32 %s22, %s29
    %s36 = sor.u32 %s34, %s35
    %p37 = scmp.eq.s32.totalorder %s36, 0
    %s39 = sadd.s32 %s38, 1
    %s40 = scalar_select %p37, %s38, %s39
    %p43 = pneg %p37
    %p44 = scmp.eq.s32.totalorder %s14, 1
    %p45 = por %p43, %p44
    %p46 = scmp.ne.s32.totalorder %s38, %s41
    %p47 = scmp.eq.s32.totalorder %s14, 0
    %p48 = por %p46, %p47
    %p49 = scmp.ne.s32.totalorder %s38, %s41
    %p50 = scmp.eq.s32.totalorder %s19, 1
    %p51 = por %p49, %p50
    %p52 = scmp.ne.s32.totalorder %s41, %s42
    %p53 = scmp.eq.s32.totalorder %s19, 0
    %p54 = por %p52, %p53
    %p55 = scmp.ne.s32.totalorder %s41, %s42
    %p56 = scmp.eq.s32.totalorder %s20, 1
    %p57 = por %p55, %p56
    %p59 = scmp.ne.s32.totalorder %s42, %s58
    %p60 = scmp.eq.s32.totalorder %s20, 0
    %p61 = por %p59, %p60
    %s62 = sadd.s32 %s22, 1
    %s63 = smul.u32 %s62, 8
    %s64 = sadd.s32 %s29, 1
    %s65 = smul.u32 %s64, 8
    %s66 = ssub.s32 %s21, %s33
    %s67 = ssub.s32 %s63, %s65
    %s68 = sor.u32 %s66, %s67
    %p69 = scmp.eq.s32.totalorder %s68, 0
    %s71 = sadd.s32 %s70, 1
    %s72 = scalar_select %p69, %s70, %s71
    %p75 = pneg %p69
    %p76 = scmp.eq.s32.totalorder %s14, 1
    %p77 = por %p75, %p76
    %p78 = scmp.ne.s32.totalorder %s70, %s73
    %p79 = scmp.eq.s32.totalorder %s14, 0
    %p80 = por %p78, %p79
    %p81 = scmp.ne.s32.totalorder %s70, %s73
    %p82 = scmp.eq.s32.totalorder %s19, 1
    %p83 = por %p81, %p82
    %p84 = scmp.ne.s32.totalorder %s73, %s74
    %p85 = scmp.eq.s32.totalorder %s19, 0
    %p86 = por %p84, %p85
    %p87 = scmp.ne.s32.totalorder %s73, %s74
    %p88 = scmp.eq.s32.totalorder %s20, 1
    %p89 = por %p87, %p88
    %p91 = scmp.ne.s32.totalorder %s74, %s90
    %p92 = scmp.eq.s32.totalorder %s20, 0
    %p93 = por %p91, %p92
    %s94 = ssub.s32 %s21, %s33
    %s95 = ssub.s32 %s22, %s29
    %s96 = sor.u32 %s94, %s95
    %p97 = scmp.eq.s32.totalorder %s96, 0
    %s99 = sadd.s32 %s98, 1
    %s100 = scalar_select %p97, %s98, %s99
    %p103 = pneg %p97
    %p104 = scmp.eq.s32.totalorder %s14, 1
    %p105 = por %p103, %p104
    %p106 = scmp.ne.s32.totalorder %s98, %s101
    %p107 = scmp.eq.s32.totalorder %s14, 0
    %p108 = por %p106, %p107
    %p109 = scmp.ne.s32.totalorder %s98, %s101
    %p110 = scmp.eq.s32.totalorder %s19, 1
    %p111 = por %p109, %p110
    %p112 = scmp.ne.s32.totalorder %s101, %s102
    %p113 = scmp.eq.s32.totalorder %s19, 0
    %p114 = por %p112, %p113
    %p115 = scmp.ne.s32.totalorder %s101, %s102
    %p116 = scmp.eq.s32.totalorder %s20, 1
    %p117 = por %p115, %p116
    %p119 = scmp.ne.s32.totalorder %s102, %s118
    %p120 = scmp.eq.s32.totalorder %s20, 0
    %p121 = por %p119, %p120
    %s122 = sadd.s32 %s22, 1
    %s123 = smul.u32 %s122, 8
    %s124 = sadd.s32 %s29, 1
    %s125 = smul.u32 %s124, 8
    %s126 = ssub.s32 %s21, %s33
    %s127 = ssub.s32 %s123, %s125
    %s128 = sor.u32 %s126, %s127
    %p129 = scmp.eq.s32.totalorder %s128, 0
    %s131 = sadd.s32 %s130, 1
    %s132 = scalar_select %p129, %s130, %s131
    %p135 = pneg %p129
    %p136 = scmp.eq.s32.totalorder %s14, 1
    %p137 = por %p135, %p136
    %p138 = scmp.ne.s32.totalorder %s130, %s133
    %p139 = scmp.eq.s32.totalorder %s14, 0
    %p140 = por %p138, %p139
    %p141 = scmp.ne.s32.totalorder %s130, %s133
    %p142 = scmp.eq.s32.totalorder %s19, 1
    %p143 = por %p141, %p142
    %p144 = scmp.ne.s32.totalorder %s133, %s134
    %p145 = scmp.eq.s32.totalorder %s19, 0
    %p146 = por %p144, %p145
    %p147 = scmp.ne.s32.totalorder %s133, %s134
    %p148 = scmp.eq.s32.totalorder %s20, 1
    %p149 = por %p147, %p148
    %p151 = scmp.ne.s32.totalorder %s134, %s150
    %p152 = scmp.eq.s32.totalorder %s20, 0
    %p153 = por %p151, %p152
    %s154 = ssub.s32 %s21, %s33
    %s155 = ssub.s32 %s22, %s29
    %s156 = sor.u32 %s154, %s155
    %p157 = scmp.eq.s32.totalorder %s156, 0
    %s159 = sadd.s32 %s158, 1
    %s160 = scalar_select %p157, %s158, %s159
    %p163 = pneg %p157
    %p164 = scmp.eq.s32.totalorder %s14, 1
    %p165 = por %p163, %p164
    %p166 = scmp.ne.s32.totalorder %s158, %s161
    %p167 = scmp.eq.s32.totalorder %s14, 0
    %p168 = por %p166, %p167
    %p169 = scmp.ne.s32.totalorder %s158, %s161
    %p170 = scmp.eq.s32.totalorder %s19, 1
    %p171 = por %p169, %p170
    %p172 = scmp.ne.s32.totalorder %s161, %s162
    %p173 = scmp.eq.s32.totalorder %s19, 0
    %p174 = por %p172, %p173
    %p175 = scmp.ne.s32.totalorder %s161, %s162
    %p176 = scmp.eq.s32.totalorder %s20, 1
    %p177 = por %p175, %p176
    %p179 = scmp.ne.s32.totalorder %s162, %s178
    %p180 = scmp.eq.s32.totalorder %s20, 0
    %p181 = por %p179, %p180
    %s182 = ssub.s32 %s21, %s33
    %s183 = ssub.s32 %s22, %s29
    %s184 = sor.u32 %s182, %s183
    %p185 = scmp.eq.s32.totalorder %s184, 0
    %s187 = sadd.s32 %s186, 1
    %s188 = scalar_select %p185, %s186, %s187
    %p191 = pneg %p185
    %p192 = scmp.eq.s32.totalorder %s14, 1
    %p193 = por %p191, %p192
    %p194 = scmp.ne.s32.totalorder %s186, %s189
    %p195 = scmp.eq.s32.totalorder %s14, 0
    %p196 = por %p194, %p195
    %p197 = scmp.ne.s32.totalorder %s186, %s189
    %p198 = scmp.eq.s32.totalorder %s19, 1
    %p199 = por %p197, %p198
    %p200 = scmp.ne.s32.totalorder %s189, %s190
    %p201 = scmp.eq.s32.totalorder %s19, 0
    %p202 = por %p200, %p201
    %p203 = scmp.ne.s32.totalorder %s189, %s190
    %p204 = scmp.eq.s32.totalorder %s20, 1
    %p205 = por %p203, %p204
    %p207 = scmp.ne.s32.totalorder %s190, %s206
    %p208 = scmp.eq.s32.totalorder %s20, 0
    %p209 = por %p207, %p208
    %s211 = sadd.s32 %s210, 1
    %p214 = scmp.eq.s32.totalorder %s14, 1
    %p215 = scmp.ne.s32.totalorder %s210, %s212
    %p216 = scmp.eq.s32.totalorder %s14, 0
    %p217 = por %p215, %p216
    %p218 = scmp.ne.s32.totalorder %s210, %s212
    %p219 = scmp.eq.s32.totalorder %s19, 1
    %p220 = por %p218, %p219
    %p221 = scmp.ne.s32.totalorder %s212, %s213
    %p222 = scmp.eq.s32.totalorder %s19, 0
    %p223 = por %p221, %p222
    %p224 = scmp.ne.s32.totalorder %s212, %s213
    %p225 = scmp.eq.s32.totalorder %s20, 1
    %p226 = por %p224, %p225
    %p228 = scmp.ne.s32.totalorder %s213, %s227
    %p229 = scmp.eq.s32.totalorder %s20, 0
    %p230 = por %p228, %p229
    %s232 = sadd.s32 %s231, 1
    %p235 = scmp.eq.s32.totalorder %s14, 1
    %p236 = scmp.ne.s32.totalorder %s231, %s233
    %p237 = scmp.eq.s32.totalorder %s14, 0
    %p238 = por %p236, %p237
    %p239 = scmp.ne.s32.totalorder %s231, %s233
    %p240 = scmp.eq.s32.totalorder %s19, 1
    %p241 = por %p239, %p240
    %p242 = scmp.ne.s32.totalorder %s233, %s234
    %p243 = scmp.eq.s32.totalorder %s19, 0
    %p244 = por %p242, %p243
    %p245 = scmp.ne.s32.totalorder %s233, %s234
    %p246 = scmp.eq.s32.totalorder %s20, 1
    %p247 = por %p245, %p246
    %p249 = scmp.ne.s32.totalorder %s234, %s248
    %p250 = scmp.eq.s32.totalorder %s20, 0
    %p251 = por %p249, %p250
    %s252 = ssub.s32 %s21, %s33
    %s253 = ssub.s32 %s22, %s29
    %s254 = sor.u32 %s252, %s253
    %p255 = scmp.eq.s32.totalorder %s254, 0
    %s257 = sadd.s32 %s256, 1
    %s258 = scalar_select %p255, %s256, %s257
    %p261 = pneg %p255
    %p262 = scmp.eq.s32.totalorder %s14, 1
    %p263 = por %p261, %p262
    %p264 = scmp.ne.s32.totalorder %s256, %s259
    %p265 = scmp.eq.s32.totalorder %s14, 0
    %p266 = por %p264, %p265
    %p267 = scmp.ne.s32.totalorder %s256, %s259
    %p268 = scmp.eq.s32.totalorder %s19, 1
    %p269 = por %p267, %p268
    %p270 = scmp.ne.s32.totalorder %s259, %s260
    %p271 = scmp.eq.s32.totalorder %s19, 0
    %p272 = por %p270, %p271
    %p273 = scmp.ne.s32.totalorder %s259, %s260
    %p274 = scmp.eq.s32.totalorder %s20, 1
    %p275 = por %p273, %p274
    %p277 = scmp.ne.s32.totalorder %s260, %s276
    %p278 = scmp.eq.s32.totalorder %s20, 0
    %p279 = por %p277, %p278
    %p280 = scmp.le.s32.totalorder 1, %s14
    %p281 = scmp.lt.s32.totalorder %s14, 3
    %p282 = pnand %p280, %p281
    %p283 = pneg %p282
    // Predicated region
    $region9: #{tpu_custom_call.1} parent=5 // pred_check
      _
    $region10: #{tpu_custom_call.1} parent=5 // pred_check_branch
      %285 = sbr.rel (%p282) target = $region12
    $region11: #{tpu_custom_call.1} parent=5 // pred_region
      %s286 = ssub.s32 %s14, 1
      // Predicated region
      $region13: #{tpu_custom_call.1} parent=11 // pred_check
        %p287 = pneg %p223
      $region14: #{tpu_custom_call.1} parent=11 // pred_check_branch
        %289 = sbr.rel (%p287) target = $region16
      $region15: #{tpu_custom_call.1} parent=11 // pred_region
        _
      $region16: #{tpu_custom_call.1} parent=11 // pred_fallthru
        _
      // Predicated region
      $region17: #{tpu_custom_call.1} parent=11 // pred_check
        %p290 = pneg %p244
      $region18: #{tpu_custom_call.1} parent=11 // pred_check_branch
        %292 = sbr.rel (%p290) target = $region20
      $region19: #{tpu_custom_call.1} parent=11 // pred_region
        _
      $region20: #{tpu_custom_call.1} parent=11 // pred_fallthru
        _
    $region12: #{tpu_custom_call.1} parent=5 // pred_fallthru
      _
    %p293 = scmp.lt.s32.totalorder %s14, 2
    // Predicated region
    $region21: #{tpu_custom_call.1} parent=5 // pred_check
      %p294 = pneg %p293
    $region22: #{tpu_custom_call.1} parent=5 // pred_check_branch
      %296 = sbr.rel (%p294) target = $region24
    $region23: #{tpu_custom_call.1} parent=5 // pred_region
      // Predicated region
      $region25: #{tpu_custom_call.1} parent=23 // pred_check
        %p297 = pneg %p48
      $region26: #{tpu_custom_call.1} parent=23 // pred_check_branch
        %299 = sbr.rel (%p297) target = $region28
      $region27: #{tpu_custom_call.1} parent=23 // pred_region
        %s300 = smul.u32 8, %s22
        %s301 = ssub.s32 9, %s300
        %p302 = scmp.lt.s32.totalorder %s301, 8
        %s303 = scalar_select %p302, %s301, 8
        %s304 = smul.u32 128, %s303
        %s305 = smul.u32 %s304, 2
        %p306 = scmp.lt.s32.totalorder %s21, 1
        %s307 = scalar_select %p306, %s21, 1
        %p308 = scmp.lt.s32.totalorder %s300, 8
        %s309 = scalar_select %p308, %s300, 8
        %s310 = smul.addr %s309, 2
        %s311 = smul.addr %s307, 18
        %s312 = sadd.s32 %s310, %s311
        %s313 = smul.addr %s312, 8
        %s314 = scalar_lea.vmem %s0, %s313
        %s315 = smul.u32 8, %s22
        %s316 = ssub.s32 9, %s315
        %p317 = scmp.lt.s32.totalorder %s316, 8
        %s318 = scalar_select %p317, %s316, 8
        %s319 = smul.u32 128, %s318
        %s320 = smul.u32 %s319, 2
      $region28: #{tpu_custom_call.1} parent=23 // pred_fallthru
        _
      // Predicated region
      $region29: #{tpu_custom_call.1} parent=23 // pred_check
        %p321 = pneg %p80
      $region30: #{tpu_custom_call.1} parent=23 // pred_check_branch
        %323 = sbr.rel (%p321) target = $region32
      $region31: #{tpu_custom_call.1} parent=23 // pred_region
        %s324 = sadd.s32 %s22, 1
        %s325 = smul.u32 %s324, 8
        %p326 = scmp.lt.s32.totalorder %s21, 1
        %s327 = scalar_select %p326, %s21, 1
        %p328 = scmp.lt.s32.totalorder %s325, 8
        %s329 = scalar_select %p328, %s325, 8
        %s330 = smul.addr %s329, 2
        %s331 = smul.addr %s327, 18
        %s332 = sadd.s32 %s330, %s331
        %s333 = smul.addr %s332, 8
        %s334 = scalar_lea.vmem %s1, %s333
        %s335 = sadd.s32 %s22, 1
        %s336 = smul.u32 %s335, 8
      $region32: #{tpu_custom_call.1} parent=23 // pred_fallthru
        _
      // Predicated region
      $region33: #{tpu_custom_call.1} parent=23 // pred_check
        %p337 = pneg %p108
      $region34: #{tpu_custom_call.1} parent=23 // pred_check_branch
        %339 = sbr.rel (%p337) target = $region36
      $region35: #{tpu_custom_call.1} parent=23 // pred_region
        %s340 = smul.u32 8, %s22
        %s341 = ssub.s32 9, %s340
        %p342 = scmp.lt.s32.totalorder %s341, 8
        %s343 = scalar_select %p342, %s341, 8
        %s344 = smul.u32 128, %s343
        %p345 = scmp.lt.s32.totalorder %s21, 1
        %s346 = scalar_select %p345, %s21, 1
        %p347 = scmp.lt.s32.totalorder %s340, 8
        %s348 = scalar_select %p347, %s340, 8
        %s349 = smul.addr %s346, 9
        %s350 = sadd.s32 %s348, %s349
        %s351 = smul.addr %s350, 8
        %s352 = scalar_lea.vmem %s2, %s351
        %s353 = smul.u32 8, %s22
        %s354 = ssub.s32 9, %s353
        %p355 = scmp.lt.s32.totalorder %s354, 8
        %s356 = scalar_select %p355, %s354, 8
        %s357 = smul.u32 128, %s356
      $region36: #{tpu_custom_call.1} parent=23 // pred_fallthru
        _
      // Predicated region
      $region37: #{tpu_custom_call.1} parent=23 // pred_check
        %p358 = pneg %p140
      $region38: #{tpu_custom_call.1} parent=23 // pred_check_branch
        %360 = sbr.rel (%p358) target = $region40
      $region39: #{tpu_custom_call.1} parent=23 // pred_region
        %s361 = sadd.s32 %s22, 1
        %s362 = smul.u32 %s361, 8
        %p363 = scmp.lt.s32.totalorder %s21, 1
        %s364 = scalar_select %p363, %s21, 1
        %p365 = scmp.lt.s32.totalorder %s362, 8
        %s366 = scalar_select %p365, %s362, 8
        %s367 = smul.addr %s364, 9
        %s368 = sadd.s32 %s366, %s367
        %s369 = smul.addr %s368, 8
        %s370 = scalar_lea.vmem %s3, %s369
        %s371 = sadd.s32 %s22, 1
        %s372 = smul.u32 %s371, 8
      $region40: #{tpu_custom_call.1} parent=23 // pred_fallthru
        _
      // Predicated region
      $region41: #{tpu_custom_call.1} parent=23 // pred_check
        %p373 = pneg %p168
      $region42: #{tpu_custom_call.1} parent=23 // pred_check_branch
        %375 = sbr.rel (%p373) target = $region44
      $region43: #{tpu_custom_call.1} parent=23 // pred_region
        %s376 = smul.u32 8, %s22
        %p377 = scmp.lt.s32.totalorder %s21, 1
        %s378 = scalar_select %p377, %s21, 1
        %p379 = scmp.lt.s32.totalorder %s376, 7
        %s380 = scalar_select %p379, %s376, 7
        %s381 = smul.addr %s380, 2
        %s382 = smul.addr %s378, 16
        %s383 = sadd.s32 %s381, %s382
        %s384 = smul.addr %s383, 8
        %s385 = scalar_lea.vmem %s4, %s384
        %s386 = smul.u32 8, %s22
      $region44: #{tpu_custom_call.1} parent=23 // pred_fallthru
        _
      // Predicated region
      $region45: #{tpu_custom_call.1} parent=23 // pred_check
        %p387 = pneg %p196
      $region46: #{tpu_custom_call.1} parent=23 // pred_check_branch
        %389 = sbr.rel (%p387) target = $region48
      $region47: #{tpu_custom_call.1} parent=23 // pred_region
        %s390 = smul.u32 8, %s22
        %p391 = scmp.lt.s32.totalorder %s21, 1
        %s392 = scalar_select %p391, %s21, 1
        %p393 = scmp.lt.s32.totalorder %s390, 7
        %s394 = scalar_select %p393, %s390, 7
        %s395 = smul.addr %s392, 8
        %s396 = sadd.s32 %s394, %s395
        %s397 = smul.addr %s396, 8
        %s398 = scalar_lea.vmem %s5, %s397
        %s399 = smul.u32 8, %s22
      $region48: #{tpu_custom_call.1} parent=23 // pred_fallthru
        _
    $region24: #{tpu_custom_call.1} parent=5 // pred_fallthru
      _
    %p400 = scmp.le.s32.totalorder 1, %s14
    %p401 = scmp.lt.s32.totalorder %s14, 3
    %p402 = pnand %p400, %p401
    %p403 = pneg %p402
    // Predicated region
    $region49: #{tpu_custom_call.1} parent=5 // pred_check
      _
    $region50: #{tpu_custom_call.1} parent=5 // pred_check_branch
      %405 = sbr.rel (%p402) target = $region52
    $region51: #{tpu_custom_call.1} parent=5 // pred_region
      %s406 = ssub.s32 %s14, 1
      %s407 = smul.u32 8, %s24
      %s408 = ssub.s32 9, %s407
      %p409 = scmp.lt.s32.totalorder %s408, 8
      %s410 = scalar_select %p409, %s408, 8
      %s411 = smul.u32 128, %s410
      %s412 = smul.u32 %s411, 2
      %p413 = scmp.lt.s32.totalorder %s23, 1
      %s414 = scalar_select %p413, %s23, 1
      %p415 = scmp.lt.s32.totalorder %s407, 8
      %s416 = scalar_select %p415, %s407, 8
      %s417 = smul.addr %s416, 2
      %s418 = smul.addr %s414, 18
      %s419 = sadd.s32 %s417, %s418
      %s420 = smul.addr %s419, 8
      %s421 = scalar_lea.vmem %s0, %s420
      %p422 = pneg %p54
      %p423 = pneg %p51
      %s424 = sadd.s32 %s24, 1
      %s425 = smul.u32 %s424, 8
      %p426 = scmp.lt.s32.totalorder %s23, 1
      %s427 = scalar_select %p426, %s23, 1
      %p428 = scmp.lt.s32.totalorder %s425, 8
      %s429 = scalar_select %p428, %s425, 8
      %s430 = smul.addr %s429, 2
      %s431 = smul.addr %s427, 18
      %s432 = sadd.s32 %s430, %s431
      %s433 = smul.addr %s432, 8
      %s434 = scalar_lea.vmem %s1, %s433
      %p435 = pneg %p86
      %p436 = pneg %p83
      %s437 = smul.u32 8, %s24
      %s438 = ssub.s32 9, %s437
      %p439 = scmp.lt.s32.totalorder %s438, 8
      %s440 = scalar_select %p439, %s438, 8
      %s441 = smul.u32 128, %s440
      %p442 = scmp.lt.s32.totalorder %s23, 1
      %s443 = scalar_select %p442, %s23, 1
      %p444 = scmp.lt.s32.totalorder %s437, 8
      %s445 = scalar_select %p444, %s437, 8
      %s446 = smul.addr %s443, 9
      %s447 = sadd.s32 %s445, %s446
      %s448 = smul.addr %s447, 8
      %s449 = scalar_lea.vmem %s2, %s448
      %p450 = pneg %p114
      %p451 = pneg %p111
      %s452 = sadd.s32 %s24, 1
      %s453 = smul.u32 %s452, 8
      %p454 = scmp.lt.s32.totalorder %s23, 1
      %s455 = scalar_select %p454, %s23, 1
      %p456 = scmp.lt.s32.totalorder %s453, 8
      %s457 = scalar_select %p456, %s453, 8
      %s458 = smul.addr %s455, 9
      %s459 = sadd.s32 %s457, %s458
      %s460 = smul.addr %s459, 8
      %s461 = scalar_lea.vmem %s3, %s460
      %p462 = pneg %p146
      %p463 = pneg %p143
      %s464 = smul.u32 8, %s24
      %p465 = scmp.lt.s32.totalorder %s23, 1
      %s466 = scalar_select %p465, %s23, 1
      %p467 = scmp.lt.s32.totalorder %s464, 7
      %s468 = scalar_select %p467, %s464, 7
      %s469 = smul.addr %s468, 2
      %s470 = smul.addr %s466, 16
      %s471 = sadd.s32 %s469, %s470
      %s472 = smul.addr %s471, 8
      %s473 = scalar_lea.vmem %s4, %s472
      %p474 = pneg %p174
      %p475 = pneg %p171
      %s476 = smul.u32 8, %s24
      %p477 = scmp.lt.s32.totalorder %s23, 1
      %s478 = scalar_select %p477, %s23, 1
      %p479 = scmp.lt.s32.totalorder %s476, 7
      %s480 = scalar_select %p479, %s476, 7
      %s481 = smul.addr %s478, 8
      %s482 = sadd.s32 %s480, %s481
      %s483 = smul.addr %s482, 8
      %s484 = scalar_lea.vmem %s5, %s483
      %p485 = pneg %p202
      %p486 = pneg %p199
      %p487 = pneg %p223
      %p488 = pneg %p220
      %p489 = pneg %p244
      %p490 = pneg %p241
      %p491 = pneg %p272
      %p492 = pneg %p269
      %s493 = smul.u32 8, %s24
      %p494 = scmp.lt.s32.totalorder %s23, 1
      %s495 = scalar_select %p494, %s23, 1
      %p496 = scmp.lt.s32.totalorder %s493, 7
      %s497 = scalar_select %p496, %s493, 7
      %s498 = smul.addr %s495, 8
      %s499 = sadd.s32 %s497, %s498
      %s500 = smul.addr %s499, 8
      %s501 = scalar_lea.vmem %s8, %s500
      %s502 = smul.u32 8, %s24
      %s503 = ssub.s32 9, %s502
      %p504 = scmp.lt.s32.totalorder %s503, 8
      %s505 = scalar_select %p504, %s503, 8
      %s506 = smul.u32 128, %s505
      %s507 = smul.u32 %s506, 2
      %p508 = scmp.lt.s32.totalorder %s23, 1
      %s509 = scalar_select %p508, %s23, 1
      %p510 = scmp.lt.s32.totalorder %s502, 8
      %s511 = scalar_select %p510, %s502, 8
      %s512 = smul.addr %s511, 2
      %s513 = smul.addr %s509, 18
      %s514 = sadd.s32 %s512, %s513
      %s515 = smul.addr %s514, 8
      %s516 = scalar_lea.vmem %s0, %s515
      %s517 = smul.u32 8, %s24
      %s518 = ssub.s32 9, %s517
      %p519 = scmp.lt.s32.totalorder %s518, 8
      %s520 = scalar_select %p519, %s518, 8
      %s521 = smul.u32 128, %s520
      %s522 = smul.u32 %s521, 2
      %s523 = sadd.s32 %s24, 1
      %s524 = smul.u32 %s523, 8
      %p525 = scmp.lt.s32.totalorder %s23, 1
      %s526 = scalar_select %p525, %s23, 1
      %p527 = scmp.lt.s32.totalorder %s524, 8
      %s528 = scalar_select %p527, %s524, 8
      %s529 = smul.addr %s528, 2
      %s530 = smul.addr %s526, 18
      %s531 = sadd.s32 %s529, %s530
      %s532 = smul.addr %s531, 8
      %s533 = scalar_lea.vmem %s1, %s532
      %s534 = sadd.s32 %s24, 1
      %s535 = smul.u32 %s534, 8
      %s536 = smul.u32 8, %s24
      %s537 = ssub.s32 9, %s536
      %p538 = scmp.lt.s32.totalorder %s537, 8
      %s539 = scalar_select %p538, %s537, 8
      %s540 = smul.u32 128, %s539
      %p541 = scmp.lt.s32.totalorder %s23, 1
      %s542 = scalar_select %p541, %s23, 1
      %p543 = scmp.lt.s32.totalorder %s536, 8
      %s544 = scalar_select %p543, %s536, 8
      %s545 = smul.addr %s542, 9
      %s546 = sadd.s32 %s544, %s545
      %s547 = smul.addr %s546, 8
      %s548 = scalar_lea.vmem %s2, %s547
      %s549 = smul.u32 8, %s24
      %s550 = ssub.s32 9, %s549
      %p551 = scmp.lt.s32.totalorder %s550, 8
      %s552 = scalar_select %p551, %s550, 8
      %s553 = smul.u32 128, %s552
      %s554 = sadd.s32 %s24, 1
      %s555 = smul.u32 %s554, 8
      %p556 = scmp.lt.s32.totalorder %s23, 1
      %s557 = scalar_select %p556, %s23, 1
      %p558 = scmp.lt.s32.totalorder %s555, 8
      %s559 = scalar_select %p558, %s555, 8
      %s560 = smul.addr %s557, 9
      %s561 = sadd.s32 %s559, %s560
      %s562 = smul.addr %s561, 8
      %s563 = scalar_lea.vmem %s3, %s562
      %s564 = sadd.s32 %s24, 1
      %s565 = smul.u32 %s564, 8
      %s566 = smul.u32 8, %s24
      %p567 = scmp.lt.s32.totalorder %s23, 1
      %s568 = scalar_select %p567, %s23, 1
      %p569 = scmp.lt.s32.totalorder %s566, 7
      %s570 = scalar_select %p569, %s566, 7
      %s571 = smul.addr %s570, 2
      %s572 = smul.addr %s568, 16
      %s573 = sadd.s32 %s571, %s572
      %s574 = smul.addr %s573, 8
      %s575 = scalar_lea.vmem %s4, %s574
      %s576 = smul.u32 8, %s24
      %s577 = smul.u32 8, %s24
      %p578 = scmp.lt.s32.totalorder %s23, 1
      %s579 = scalar_select %p578, %s23, 1
      %p580 = scmp.lt.s32.totalorder %s577, 7
      %s581 = scalar_select %p580, %s577, 7
      %s582 = smul.addr %s579, 8
      %s583 = sadd.s32 %s581, %s582
      %s584 = smul.addr %s583, 8
      %s585 = scalar_lea.vmem %s5, %s584
      %s586 = smul.u32 8, %s24
      %s587 = smul.u32 8, %s24
      %p588 = scmp.lt.s32.totalorder %s23, 1
      %s589 = scalar_select %p588, %s23, 1
      %p590 = scmp.lt.s32.totalorder %s587, 7
      %s591 = scalar_select %p590, %s587, 7
      %s592 = smul.addr %s589, 8
      %s593 = sadd.s32 %s591, %s592
      %s594 = smul.addr %s593, 8
      %s595 = scalar_lea.vmem %s8, %s594
      %s596 = smul.u32 8, %s24
      %v597 = vld [vmem:[%s516] sm:$0xff]
      %v598 = vld [vmem:[%s516 + $0x8] sm:$0x1]
      %v599 = vld [vmem:[%s516 + $0x10] sm:$0xff]
      %v600 = vld [vmem:[%s516 + $0x18] sm:$0x1]
      %v601 = vld [vmem:[%s516 + $0x20] sm:$0xff]
      %v602 = vld [vmem:[%s516 + $0x28] sm:$0x1]
      %v603 = vld [vmem:[%s516 + $0x30] sm:$0xff]
      %v604 = vld [vmem:[%s516 + $0x38] sm:$0x1]
      %v605 = vld [vmem:[%s516 + $0x40] sm:$0xff]
      %v606 = vld [vmem:[%s516 + $0x48] sm:$0x1]
      %v607 = vld [vmem:[%s516 + $0x50] sm:$0xff]
      %v608 = vld [vmem:[%s516 + $0x58] sm:$0x1]
      %v609 = vld [vmem:[%s516 + $0x60] sm:$0xff]
      %v610 = vld [vmem:[%s516 + $0x68] sm:$0x1]
      %v611 = vld [vmem:[%s516 + $0x70] sm:$0xff]
      %v612 = vld [vmem:[%s516 + $0x78] sm:$0x1]
      %v613 = vld [vmem:[%s533] sm:$0xff]
      %v614 = vld [vmem:[%s533 + $0x8] sm:$0x1]
      %v615 = vld [vmem:[%s548] sm:$0xff]
      %v616 = vld [vmem:[%s548 + $0x8] sm:$0xff]
      %v617 = vld [vmem:[%s548 + $0x10] sm:$0xff]
      %v618 = vld [vmem:[%s548 + $0x18] sm:$0xff]
      %v619 = vld [vmem:[%s548 + $0x20] sm:$0xff]
      %v620 = vld [vmem:[%s548 + $0x28] sm:$0xff]
      %v621 = vld [vmem:[%s548 + $0x30] sm:$0xff]
      %v622 = vld [vmem:[%s548 + $0x38] sm:$0xff]
      %v623 = vld [vmem:[%s563] sm:$0xff]
      %v624 = vld [vmem:[%s575] sm:$0xff]
      %v625 = vld [vmem:[%s575 + $0x8] sm:$0x1]
      %v626 = vld [vmem:[%s575 + $0x10] sm:$0xff]
      %v627 = vld [vmem:[%s575 + $0x18] sm:$0x1]
      %v628 = vld [vmem:[%s575 + $0x20] sm:$0xff]
      %v629 = vld [vmem:[%s575 + $0x28] sm:$0x1]
      %v630 = vld [vmem:[%s575 + $0x30] sm:$0xff]
      %v631 = vld [vmem:[%s575 + $0x38] sm:$0x1]
      %v632 = vld [vmem:[%s575 + $0x40] sm:$0xff]
      %v633 = vld [vmem:[%s575 + $0x48] sm:$0x1]
      %v634 = vld [vmem:[%s575 + $0x50] sm:$0xff]
      %v635 = vld [vmem:[%s575 + $0x58] sm:$0x1]
      %v636 = vld [vmem:[%s575 + $0x60] sm:$0xff]
      %v637 = vld [vmem:[%s575 + $0x68] sm:$0x1]
      %v638 = vld [vmem:[%s575 + $0x70] sm:$0xff]
      %v639 = vld [vmem:[%s575 + $0x78] sm:$0x1]
      %v640 = vld [vmem:[%s585] sm:$0xff]
      %v641 = vld [vmem:[%s585 + $0x8] sm:$0xff]
      %v642 = vld [vmem:[%s585 + $0x10] sm:$0xff]
      %v643 = vld [vmem:[%s585 + $0x18] sm:$0xff]
      %v644 = vld [vmem:[%s585 + $0x20] sm:$0xff]
      %v645 = vld [vmem:[%s585 + $0x28] sm:$0xff]
      %v646 = vld [vmem:[%s585 + $0x30] sm:$0xff]
      %v647 = vld [vmem:[%s585 + $0x38] sm:$0xff]
      %v648 = vld [vmem:[%s7] sm:$0x1]
      %v650 = vlaneseq
      %v651 = vshrl.u32 %v650, 7
      %v652 = vsub.s32 0, %v651
      %v653 = vrot.slane %v648, %v652
      %v655 = vld [vmem:[%s6] sm:$0xf]
      %vm656 = vcmask 31744
      %v658 = vsel %vm656, %v597, 0
      %v661 = vsel %vm656, %v599, 0
      %v664 = vsel %vm656, %v601, 0
      %v667 = vsel %vm656, %v603, 0
      %v670 = vsel %vm656, %v605, 0
      %v673 = vsel %vm656, %v607, 0
      %v676 = vsel %vm656, %v609, 0
      %v679 = vsel %vm656, %v611, 0
      %vm681 = vcmask 1043456
      %v683 = vsel %vm681, %v655, 0
      %685 = vmatprep.subr.mxu0 0.0
      %686 = vmatpush1.msra.mxu0 %v683
      %687 = vmatprep.subr.mxu0 0.0
      %688 = vmatpush1.msra.mxu0 0.0
      %689 = vmatprep.subr.mxu0 0.0
      %690 = vmatpush1.msra.mxu0 0.0
      %691 = vmatprep.subr.mxu0 0.0
      %692 = vmatpush1.msra.mxu0 0.0
      %693 = vmatprep.subr.mxu0 0.0
      %694 = vmatpush1.msra.mxu0 0.0
      %695 = vmatprep.subr.mxu0 0.0
      %696 = vmatpush1.msra.mxu0 0.0
      %697 = vmatprep.subr.mxu0 0.0
      %698 = vmatpush1.msra.mxu0 0.0
      %699 = vmatprep.subr.mxu0 0.0
      %700 = vmatpush1.msra.mxu0 0.0
      %701 = vmatprep.subr.mxu0 0.0
      %702 = vmatpush1.msra.mxu0 0.0
      %703 = vmatprep.subr.mxu0 0.0
      %704 = vmatpush1.msra.mxu0 0.0
      %705 = vmatprep.subr.mxu0 0.0
      %706 = vmatpush1.msra.mxu0 0.0
      %707 = vmatprep.subr.mxu0 0.0
      %708 = vmatpush1.msra.mxu0 0.0
      %709 = vmatprep.subr.mxu0 0.0
      %710 = vmatpush1.msra.mxu0 0.0
      %711 = vmatprep.subr.mxu0 0.0
      %712 = vmatpush1.msra.mxu0 0.0
      %713 = vmatprep.subr.mxu0 0.0
      %714 = vmatpush1.msra.mxu0 0.0
      %715 = vmatprep.subr.mxu0 0.0
      %716 = vmatpush1.msra.mxu0 0.0
      %717 = vmatprep.subr.mxu0 0.0
      %718 = vmatpush1.msra.mxu0 0.0
      %719 = vmatprep.subr.mxu0 0.0
      %720 = vmatpush1.msra.mxu0 0.0
      %721 = vmatprep.subr.mxu0 0.0
      %722 = vmatpush1.msra.mxu0 0.0
      %723 = vmatprep.subr.mxu0 0.0
      %724 = vmatpush1.msra.mxu0 0.0
      %725 = vmatprep.subr.mxu0 0.0
      %726 = vmatpush1.msra.mxu0 0.0
      %727 = vmatprep.subr.mxu0 0.0
      %728 = vmatpush1.msra.mxu0 0.0
      %729 = vmatprep.subr.mxu0 0.0
      %730 = vmatpush1.msra.mxu0 0.0
      %731 = vmatprep.subr.mxu0 0.0
      %732 = vmatpush1.msra.mxu0 0.0
      %733 = vmatprep.subr.mxu0 0.0
      %734 = vmatpush1.msra.mxu0 0.0
      %735 = vmatprep.subr.mxu0 0.0
      %736 = vmatpush1.msra.mxu0 0.0
      %737 = vmatprep.subr.mxu0 0.0
      %738 = vmatpush1.msra.mxu0 0.0
      %739 = vmatprep.subr.mxu0 0.0
      %740 = vmatpush1.msra.mxu0 0.0
      %741 = vmatprep.subr.mxu0 0.0
      %742 = vmatpush1.msra.mxu0 0.0
      %743 = vmatprep.subr.mxu0 0.0
      %744 = vmatpush1.msra.mxu0 0.0
      %745 = vmatprep.subr.mxu0 0.0
      %746 = vmatpush1.msra.mxu0 0.0
      %747 = vmatprep.subr.mxu0 0.0
      %748 = vmatpush1.msra.mxu0 0.0
      %749 = vmatprep.mubr.f32.mxu0 0.0
      %750 = vmatmul.mubr.f32.gmra.mrb[0].mxu0 %v658
      %v751 = vpop.f32.mrb[0].mxu0
      %v752 = vadd.f32 0.0, %v751
      %v753 = vpop.f32.mrb[0].mxu0
      %754 = vmatprep.mubr.f32.mxu0 0.0
      %755 = vmatmul.mubr.f32.gmra.mrb[0].mxu0 %v661
      %v756 = vpop.f32.mrb[0].mxu0
      %v757 = vadd.f32 0.0, %v756
      %v758 = vpop.f32.mrb[0].mxu0
      %759 = vmatprep.mubr.f32.mxu0 0.0
      %760 = vmatmul.mubr.f32.gmra.mrb[0].mxu0 %v664
      %v761 = vpop.f32.mrb[0].mxu0
      %v762 = vadd.f32 0.0, %v761
      %v763 = vpop.f32.mrb[0].mxu0
      %764 = vmatprep.mubr.f32.mxu0 0.0
      %765 = vmatmul.mubr.f32.gmra.mrb[0].mxu0 %v667
      %v766 = vpop.f32.mrb[0].mxu0
      %v767 = vadd.f32 0.0, %v766
      %v768 = vpop.f32.mrb[0].mxu0
      %769 = vmatprep.mubr.f32.mxu0 0.0
      %770 = vmatmul.mubr.f32.gmra.mrb[0].mxu0 %v670
      %v771 = vpop.f32.mrb[0].mxu0
      %v772 = vadd.f32 0.0, %v771
      %v773 = vpop.f32.mrb[0].mxu0
      %774 = vmatprep.mubr.f32.mxu0 0.0
      %775 = vmatmul.mubr.f32.gmra.mrb[0].mxu0 %v673
      %v776 = vpop.f32.mrb[0].mxu0
      %v777 = vadd.f32 0.0, %v776
      %v778 = vpop.f32.mrb[0].mxu0
      %779 = vmatprep.mubr.f32.mxu0 0.0
      %780 = vmatmul.mubr.f32.gmra.mrb[0].mxu0 %v676
      %v781 = vpop.f32.mrb[0].mxu0
      %v782 = vadd.f32 0.0, %v781
      %v783 = vpop.f32.mrb[0].mxu0
      %784 = vmatprep.mubr.f32.mxu0 0.0
      %785 = vmatmul.mubr.f32.gmra.mrb[0].mxu0 %v679
      %v786 = vpop.f32.mrb[0].mxu0
      %v787 = vadd.f32 0.0, %v786
      %v788 = vpop.f32.mrb[0].mxu0
      %789 = vdwg.mxu0
      %v790 = vadd.f32 %v653, %v752
      %v791 = vadd.f32 %v653, %v757
      %v792 = vadd.f32 %v653, %v762
      %v793 = vadd.f32 %v653, %v767
      %v794 = vadd.f32 %v653, %v772
      %v795 = vadd.f32 %v653, %v777
      %v796 = vadd.f32 %v653, %v782
      %v797 = vadd.f32 %v653, %v787
      %s798 = scalar_lea.vmem %s6, 4
      %v799 = vld [vmem:[%s798] sm:$0xf]
      %v801 = vsel %vm656, %v615, 0
      %v804 = vsel %vm656, %v616, 0
      %v807 = vsel %vm656, %v617, 0
      %v810 = vsel %vm656, %v618, 0
      %v813 = vsel %vm656, %v619, 0
      %v816 = vsel %vm656, %v620, 0
      %v819 = vsel %vm656, %v621, 0
      %v822 = vsel %vm656, %v622, 0
      %v825 = vsel %vm681, %v799, 0
      %827 = vmatprep.subr.mxu0 0.0
      %828 = vmatpush1.msra.mxu0 %v825
      %829 = vmatprep.subr.mxu0 0.0
      %830 = vmatpush1.msra.mxu0 0.0
      %831 = vmatprep.subr.mxu0 0.0
      %832 = vmatpush1.msra.mxu0 0.0
      %833 = vmatprep.subr.mxu0 0.0
      %834 = vmatpush1.msra.mxu0 0.0
      %835 = vmatprep.subr.mxu0 0.0
      %836 = vmatpush1.msra.mxu0 0.0
      %837 = vmatprep.subr.mxu0 0.0
      %838 = vmatpush1.msra.mxu0 0.0
      %839 = vmatprep.subr.mxu0 0.0
      %840 = vmatpush1.msra.mxu0 0.0
      %841 = vmatprep.subr.mxu0 0.0
      %842 = vmatpush1.msra.mxu0 0.0
      %843 = vmatprep.subr.mxu0 0.0
      %844 = vmatpush1.msra.mxu0 0.0
      %845 = vmatprep.subr.mxu0 0.0
      %846 = vmatpush1.msra.mxu0 0.0
      %847 = vmatprep.subr.mxu0 0.0
      %848 = vmatpush1.msra.mxu0 0.0
      %849 = vmatprep.subr.mxu0 0.0
      %850 = vmatpush1.msra.mxu0 0.0
      %851 = vmatprep.subr.mxu0 0.0
      %852 = vmatpush1.msra.mxu0 0.0
      %853 = vmatprep.subr.mxu0 0.0
      %854 = vmatpush1.msra.mxu0 0.0
      %855 = vmatprep.subr.mxu0 0.0
      %856 = vmatpush1.msra.mxu0 0.0
      %857 = vmatprep.subr.mxu0 0.0
      %858 = vmatpush1.msra.mxu0 0.0
      %859 = vmatprep.subr.mxu0 0.0
      %860 = vmatpush1.msra.mxu0 0.0
      %861 = vmatprep.subr.mxu0 0.0
      %862 = vmatpush1.msra.mxu0 0.0
      %863 = vmatprep.subr.mxu0 0.0
      %864 = vmatpush1.msra.mxu0 0.0
      %865 = vmatprep.subr.mxu0 0.0
      %866 = vmatpush1.msra.mxu0 0.0
      %867 = vmatprep.subr.mxu0 0.0
      %868 = vmatpush1.msra.mxu0 0.0
      %869 = vmatprep.subr.mxu0 0.0
      %870 = vmatpush1.msra.mxu0 0.0
      %871 = vmatprep.subr.mxu0 0.0
      %872 = vmatpush1.msra.mxu0 0.0
      %873 = vmatprep.subr.mxu0 0.0
      %874 = vmatpush1.msra.mxu0 0.0
      %875 = vmatprep.subr.mxu0 0.0
      %876 = vmatpush1.msra.mxu0 0.0
      %877 = vmatprep.subr.mxu0 0.0
      %878 = vmatpush1.msra.mxu0 0.0
      %879 = vmatprep.subr.mxu0 0.0
      %880 = vmatpush1.msra.mxu0 0.0
      %881 = vmatprep.subr.mxu0 0.0
      %882 = vmatpush1.msra.mxu0 0.0
      %883 = vmatprep.subr.mxu0 0.0
      %884 = vmatpush1.msra.mxu0 0.0
      %885 = vmatprep.subr.mxu0 0.0
      %886 = vmatpush1.msra.mxu0 0.0
      %887 = vmatprep.subr.mxu0 0.0
      %888 = vmatpush1.msra.mxu0 0.0
      %889 = vmatprep.subr.mxu0 0.0
      %890 = vmatpush1.msra.mxu0 0.0
      %891 = vmatprep.mubr.f32.mxu0 0.0
      %892 = vmatmul.mubr.f32.gmra.mrb[0].mxu0 %v801
      %v893 = vpop.f32.mrb[0].mxu0
      %v894 = vadd.f32 0.0, %v893
      %v895 = vpop.f32.mrb[0].mxu0
      %896 = vmatprep.mubr.f32.mxu0 0.0
      %897 = vmatmul.mubr.f32.gmra.mrb[0].mxu0 %v804
      %v898 = vpop.f32.mrb[0].mxu0
      %v899 = vadd.f32 0.0, %v898
      %v900 = vpop.f32.mrb[0].mxu0
      %901 = vmatprep.mubr.f32.mxu0 0.0
      %902 = vmatmul.mubr.f32.gmra.mrb[0].mxu0 %v807
      %v903 = vpop.f32.mrb[0].mxu0
      %v904 = vadd.f32 0.0, %v903
      %v905 = vpop.f32.mrb[0].mxu0
      %906 = vmatprep.mubr.f32.mxu0 0.0
      %907 = vmatmul.mubr.f32.gmra.mrb[0].mxu0 %v810
      %v908 = vpop.f32.mrb[0].mxu0
      %v909 = vadd.f32 0.0, %v908
      %v910 = vpop.f32.mrb[0].mxu0
      %911 = vmatprep.mubr.f32.mxu0 0.0
      %912 = vmatmul.mubr.f32.gmra.mrb[0].mxu0 %v813
      %v913 = vpop.f32.mrb[0].mxu0
      %v914 = vadd.f32 0.0, %v913
      %v915 = vpop.f32.mrb[0].mxu0
      %916 = vmatprep.mubr.f32.mxu0 0.0
      %917 = vmatmul.mubr.f32.gmra.mrb[0].mxu0 %v816
      %v918 = vpop.f32.mrb[0].mxu0
      %v919 = vadd.f32 0.0, %v918
      %v920 = vpop.f32.mrb[0].mxu0
      %921 = vmatprep.mubr.f32.mxu0 0.0
      %922 = vmatmul.mubr.f32.gmra.mrb[0].mxu0 %v819
      %v923 = vpop.f32.mrb[0].mxu0
      %v924 = vadd.f32 0.0, %v923
      %v925 = vpop.f32.mrb[0].mxu0
      %926 = vmatprep.mubr.f32.mxu0 0.0
      %927 = vmatmul.mubr.f32.gmra.mrb[0].mxu0 %v822
      %v928 = vpop.f32.mrb[0].mxu0
      %v929 = vadd.f32 0.0, %v928
      %v930 = vpop.f32.mrb[0].mxu0
      %931 = vdwg.mxu0
      %v932 = vadd.f32 %v790, %v894
      %v933 = vadd.f32 %v791, %v899
      %v934 = vadd.f32 %v792, %v904
      %v935 = vadd.f32 %v793, %v909
      %v936 = vadd.f32 %v794, %v914
      %v937 = vadd.f32 %v795, %v919
      %v938 = vadd.f32 %v796, %v924
      %v939 = vadd.f32 %v797, %v929
      %vm948 = vcmask 1046528
      %v949 = vrot.slane %v597, 1
      %v950 = vrot.slane %v598, 1
      %v951 = vsel %vm948, %v949, %v950
      %v952 = vrot.slane %v599, 1
      %v953 = vrot.slane %v600, 1
      %v954 = vsel %vm948, %v952, %v953
      %v955 = vrot.slane %v601, 1
      %v956 = vrot.slane %v602, 1
      %v957 = vsel %vm948, %v955, %v956
      %v958 = vrot.slane %v603, 1
      %v959 = vrot.slane %v604, 1
      %v960 = vsel %vm948, %v958, %v959
      %v961 = vrot.slane %v605, 1
      %v962 = vrot.slane %v606, 1
      %v963 = vsel %vm948, %v961, %v962
      %v964 = vrot.slane %v607, 1
      %v965 = vrot.slane %v608, 1
      %v966 = vsel %vm948, %v964, %v965
      %v967 = vrot.slane %v609, 1
      %v968 = vrot.slane %v610, 1
      %v969 = vsel %vm948, %v967, %v968
      %v970 = vrot.slane %v611, 1
      %v971 = vrot.slane %v612, 1
      %v972 = vsel %vm948, %v970, %v971
      %s973 = scalar_lea.vmem %s6, 8
      %v974 = vld [vmem:[%s973] sm:$0xf]
      %v975 = vsel %vm656, %v951, 0
      %v977 = vsel %vm656, %v954, 0
      %v979 = vsel %vm656, %v957, 0
      %v981 = vsel %vm656, %v960, 0
      %v983 = vsel %vm656, %v963, 0
      %v985 = vsel %vm656, %v966, 0
      %v987 = vsel %vm656, %v969, 0
      %v989 = vsel %vm656, %v972, 0
      %v992 = vsel %vm681, %v974, 0
      %994 = vmatprep.subr.mxu0 0.0
      %995 = vmatpush1.msra.mxu0 %v992
      %996 = vmatprep.subr.mxu0 0.0
      %997 = vmatpush1.msra.mxu0 0.0
      %998 = vmatprep.subr.mxu0 0.0
      %999 = vmatpush1.msra.mxu0 0.0
      %1000 = vmatprep.subr.mxu0 0.0
      %1001 = vmatpush1.msra.mxu0 0.0
      %1002 = vmatprep.subr.mxu0 0.0
      %1003 = vmatpush1.msra.mxu0 0.0
      %1004 = vmatprep.subr.mxu0 0.0
      %1005 = vmatpush1.msra.mxu0 0.0
      %1006 = vmatprep.subr.mxu0 0.0
      %1007 = vmatpush1.msra.mxu0 0.0
      %1008 = vmatprep.subr.mxu0 0.0
      %1009 = vmatpush1.msra.mxu0 0.0
      %1010 = vmatprep.subr.mxu0 0.0
      %1011 = vmatpush1.msra.mxu0 0.0
      %1012 = vmatprep.subr.mxu0 0.0
      %1013 = vmatpush1.msra.mxu0 0.0
      %1014 = vmatprep.subr.mxu0 0.0
      %1015 = vmatpush1.msra.mxu0 0.0
      %1016 = vmatprep.subr.mxu0 0.0
      %1017 = vmatpush1.msra.mxu0 0.0
      %1018 = vmatprep.subr.mxu0 0.0
      %1019 = vmatpush1.msra.mxu0 0.0
      %1020 = vmatprep.subr.mxu0 0.0
      %1021 = vmatpush1.msra.mxu0 0.0
      %1022 = vmatprep.subr.mxu0 0.0
      %1023 = vmatpush1.msra.mxu0 0.0
      %1024 = vmatprep.subr.mxu0 0.0
      %1025 = vmatpush1.msra.mxu0 0.0
      %1026 = vmatprep.subr.mxu0 0.0
      %1027 = vmatpush1.msra.mxu0 0.0
      %1028 = vmatprep.subr.mxu0 0.0
      %1029 = vmatpush1.msra.mxu0 0.0
      %1030 = vmatprep.subr.mxu0 0.0
      %1031 = vmatpush1.msra.mxu0 0.0
      %1032 = vmatprep.subr.mxu0 0.0
      %1033 = vmatpush1.msra.mxu0 0.0
      %1034 = vmatprep.subr.mxu0 0.0
      %1035 = vmatpush1.msra.mxu0 0.0
      %1036 = vmatprep.subr.mxu0 0.0
      %1037 = vmatpush1.msra.mxu0 0.0
      %1038 = vmatprep.subr.mxu0 0.0
      %1039 = vmatpush1.msra.mxu0 0.0
      %1040 = vmatprep.subr.mxu0 0.0
      %1041 = vmatpush1.msra.mxu0 0.0
      %1042 = vmatprep.subr.mxu0 0.0
      %1043 = vmatpush1.msra.mxu0 0.0
      %1044 = vmatprep.subr.mxu0 0.0
      %1045 = vmatpush1.msra.mxu0 0.0
      %1046 = vmatprep.subr.mxu0 0.0
      %1047 = vmatpush1.msra.mxu0 0.0
      %1048 = vmatprep.subr.mxu0 0.0
      %1049 = vmatpush1.msra.mxu0 0.0
      %1050 = vmatprep.subr.mxu0 0.0
      %1051 = vmatpush1.msra.mxu0 0.0
      %1052 = vmatprep.subr.mxu0 0.0
      %1053 = vmatpush1.msra.mxu0 0.0
      %1054 = vmatprep.subr.mxu0 0.0
      %1055 = vmatpush1.msra.mxu0 0.0
      %1056 = vmatprep.subr.mxu0 0.0
      %1057 = vmatpush1.msra.mxu0 0.0
      %1058 = vmatprep.mubr.f32.mxu0 0.0
      %1059 = vmatmul.mubr.f32.gmra.mrb[0].mxu0 %v975
      %v1060 = vpop.f32.mrb[0].mxu0
      %v1061 = vadd.f32 0.0, %v1060
      %v1062 = vpop.f32.mrb[0].mxu0
      %1063 = vmatprep.mubr.f32.mxu0 0.0
      %1064 = vmatmul.mubr.f32.gmra.mrb[0].mxu0 %v977
      %v1065 = vpop.f32.mrb[0].mxu0
      %v1066 = vadd.f32 0.0, %v1065
      %v1067 = vpop.f32.mrb[0].mxu0
      %1068 = vmatprep.mubr.f32.mxu0 0.0
      %1069 = vmatmul.mubr.f32.gmra.mrb[0].mxu0 %v979
      %v1070 = vpop.f32.mrb[0].mxu0
      %v1071 = vadd.f32 0.0, %v1070
      %v1072 = vpop.f32.mrb[0].mxu0
      %1073 = vmatprep.mubr.f32.mxu0 0.0
      %1074 = vmatmul.mubr.f32.gmra.mrb[0].mxu0 %v981
      %v1075 = vpop.f32.mrb[0].mxu0
      %v1076 = vadd.f32 0.0, %v1075
      %v1077 = vpop.f32.mrb[0].mxu0
      %1078 = vmatprep.mubr.f32.mxu0 0.0
      %1079 = vmatmul.mubr.f32.gmra.mrb[0].mxu0 %v983
      %v1080 = vpop.f32.mrb[0].mxu0
      %v1081 = vadd.f32 0.0, %v1080
      %v1082 = vpop.f32.mrb[0].mxu0
      %1083 = vmatprep.mubr.f32.mxu0 0.0
      %1084 = vmatmul.mubr.f32.gmra.mrb[0].mxu0 %v985
      %v1085 = vpop.f32.mrb[0].mxu0
      %v1086 = vadd.f32 0.0, %v1085
      %v1087 = vpop.f32.mrb[0].mxu0
      %1088 = vmatprep.mubr.f32.mxu0 0.0
      %1089 = vmatmul.mubr.f32.gmra.mrb[0].mxu0 %v987
      %v1090 = vpop.f32.mrb[0].mxu0
      %v1091 = vadd.f32 0.0, %v1090
      %v1092 = vpop.f32.mrb[0].mxu0
      %1093 = vmatprep.mubr.f32.mxu0 0.0
      %1094 = vmatmul.mubr.f32.gmra.mrb[0].mxu0 %v989
      %v1095 = vpop.f32.mrb[0].mxu0
      %v1096 = vadd.f32 0.0, %v1095
      %v1097 = vpop.f32.mrb[0].mxu0
      %1098 = vdwg.mxu0
      %v1099 = vadd.f32 %v932, %v1061
      %v1100 = vadd.f32 %v933, %v1066
      %v1101 = vadd.f32 %v934, %v1071
      %v1102 = vadd.f32 %v935, %v1076
      %v1103 = vadd.f32 %v936, %v1081
      %v1104 = vadd.f32 %v937, %v1086
      %v1105 = vadd.f32 %v938, %v1091
      %v1106 = vadd.f32 %v939, %v1096
      %s1107 = scalar_lea.vmem %s6, 12
      %v1108 = vld [vmem:[%s1107] sm:$0xf]
      %v1110 = vsel %vm656, %v624, 0
      %v1113 = vsel %vm656, %v626, 0
      %v1116 = vsel %vm656, %v628, 0
      %v1119 = vsel %vm656, %v630, 0
      %v1122 = vsel %vm656, %v632, 0
      %v1125 = vsel %vm656, %v634, 0
      %v1128 = vsel %vm656, %v636, 0
      %v1131 = vsel %vm656, %v638, 0
      %v1134 = vsel %vm681, %v1108, 0
      %1136 = vmatprep.subr.mxu0 0.0
      %1137 = vmatpush1.msra.mxu0 %v1134
      %1138 = vmatprep.subr.mxu0 0.0
      %1139 = vmatpush1.msra.mxu0 0.0
      %1140 = vmatprep.subr.mxu0 0.0
      %1141 = vmatpush1.msra.mxu0 0.0
      %1142 = vmatprep.subr.mxu0 0.0
      %1143 = vmatpush1.msra.mxu0 0.0
      %1144 = vmatprep.subr.mxu0 0.0
      %1145 = vmatpush1.msra.mxu0 0.0
      %1146 = vmatprep.subr.mxu0 0.0
      %1147 = vmatpush1.msra.mxu0 0.0
      %1148 = vmatprep.subr.mxu0 0.0
      %1149 = vmatpush1.msra.mxu0 0.0
      %1150 = vmatprep.subr.mxu0 0.0
      %1151 = vmatpush1.msra.mxu0 0.0
      %1152 = vmatprep.subr.mxu0 0.0
      %1153 = vmatpush1.msra.mxu0 0.0
      %1154 = vmatprep.subr.mxu0 0.0
      %1155 = vmatpush1.msra.mxu0 0.0
      %1156 = vmatprep.subr.mxu0 0.0
      %1157 = vmatpush1.msra.mxu0 0.0
      %1158 = vmatprep.subr.mxu0 0.0
      %1159 = vmatpush1.msra.mxu0 0.0
      %1160 = vmatprep.subr.mxu0 0.0
      %1161 = vmatpush1.msra.mxu0 0.0
      %1162 = vmatprep.subr.mxu0 0.0
      %1163 = vmatpush1.msra.mxu0 0.0
      %1164 = vmatprep.subr.mxu0 0.0
      %1165 = vmatpush1.msra.mxu0 0.0
      %1166 = vmatprep.subr.mxu0 0.0
      %1167 = vmatpush1.msra.mxu0 0.0
      %1168 = vmatprep.subr.mxu0 0.0
      %1169 = vmatpush1.msra.mxu0 0.0
      %1170 = vmatprep.subr.mxu0 0.0
      %1171 = vmatpush1.msra.mxu0 0.0
      %1172 = vmatprep.subr.mxu0 0.0
      %1173 = vmatpush1.msra.mxu0 0.0
      %1174 = vmatprep.subr.mxu0 0.0
      %1175 = vmatpush1.msra.mxu0 0.0
      %1176 = vmatprep.subr.mxu0 0.0
      %1177 = vmatpush1.msra.mxu0 0.0
      %1178 = vmatprep.subr.mxu0 0.0
      %1179 = vmatpush1.msra.mxu0 0.0
      %1180 = vmatprep.subr.mxu0 0.0
      %1181 = vmatpush1.msra.mxu0 0.0
      %1182 = vmatprep.subr.mxu0 0.0
      %1183 = vmatpush1.msra.mxu0 0.0
      %1184 = vmatprep.subr.mxu0 0.0
      %1185 = vmatpush1.msra.mxu0 0.0
      %1186 = vmatprep.subr.mxu0 0.0
      %1187 = vmatpush1.msra.mxu0 0.0
      %1188 = vmatprep.subr.mxu0 0.0
      %1189 = vmatpush1.msra.mxu0 0.0
      %1190 = vmatprep.subr.mxu0 0.0
      %1191 = vmatpush1.msra.mxu0 0.0
      %1192 = vmatprep.subr.mxu0 0.0
      %1193 = vmatpush1.msra.mxu0 0.0
      %1194 = vmatprep.subr.mxu0 0.0
      %1195 = vmatpush1.msra.mxu0 0.0
      %1196 = vmatprep.subr.mxu0 0.0
      %1197 = vmatpush1.msra.mxu0 0.0
      %1198 = vmatprep.subr.mxu0 0.0
      %1199 = vmatpush1.msra.mxu0 0.0
      %1200 = vmatprep.mubr.f32.mxu0 0.0
      %1201 = vmatmul.mubr.f32.gmra.mrb[0].mxu0 %v1110
      %v1202 = vpop.f32.mrb[0].mxu0
      %v1203 = vadd.f32 0.0, %v1202
      %v1204 = vpop.f32.mrb[0].mxu0
      %1205 = vmatprep.mubr.f32.mxu0 0.0
      %1206 = vmatmul.mubr.f32.gmra.mrb[0].mxu0 %v1113
      %v1207 = vpop.f32.mrb[0].mxu0
      %v1208 = vadd.f32 0.0, %v1207
      %v1209 = vpop.f32.mrb[0].mxu0
      %1210 = vmatprep.mubr.f32.mxu0 0.0
      %1211 = vmatmul.mubr.f32.gmra.mrb[0].mxu0 %v1116
      %v1212 = vpop.f32.mrb[0].mxu0
      %v1213 = vadd.f32 0.0, %v1212
      %v1214 = vpop.f32.mrb[0].mxu0
      %1215 = vmatprep.mubr.f32.mxu0 0.0
      %1216 = vmatmul.mubr.f32.gmra.mrb[0].mxu0 %v1119
      %v1217 = vpop.f32.mrb[0].mxu0
      %v1218 = vadd.f32 0.0, %v1217
      %v1219 = vpop.f32.mrb[0].mxu0
      %1220 = vmatprep.mubr.f32.mxu0 0.0
      %1221 = vmatmul.mubr.f32.gmra.mrb[0].mxu0 %v1122
      %v1222 = vpop.f32.mrb[0].mxu0
      %v1223 = vadd.f32 0.0, %v1222
      %v1224 = vpop.f32.mrb[0].mxu0
      %1225 = vmatprep.mubr.f32.mxu0 0.0
      %1226 = vmatmul.mubr.f32.gmra.mrb[0].mxu0 %v1125
      %v1227 = vpop.f32.mrb[0].mxu0
      %v1228 = vadd.f32 0.0, %v1227
      %v1229 = vpop.f32.mrb[0].mxu0
      %1230 = vmatprep.mubr.f32.mxu0 0.0
      %1231 = vmatmul.mubr.f32.gmra.mrb[0].mxu0 %v1128
      %v1232 = vpop.f32.mrb[0].mxu0
      %v1233 = vadd.f32 0.0, %v1232
      %v1234 = vpop.f32.mrb[0].mxu0
      %1235 = vmatprep.mubr.f32.mxu0 0.0
      %1236 = vmatmul.mubr.f32.gmra.mrb[0].mxu0 %v1131
      %v1237 = vpop.f32.mrb[0].mxu0
      %v1238 = vadd.f32 0.0, %v1237
      %v1239 = vpop.f32.mrb[0].mxu0
      %1240 = vdwg.mxu0
      %v1241 = vadd.f32 %v1099, %v1203
      %v1242 = vadd.f32 %v1100, %v1208
      %v1243 = vadd.f32 %v1101, %v1213
      %v1244 = vadd.f32 %v1102, %v1218
      %v1245 = vadd.f32 %v1103, %v1223
      %v1246 = vadd.f32 %v1104, %v1228
      %v1247 = vadd.f32 %v1105, %v1233
      %v1248 = vadd.f32 %v1106, %v1238
      %s1249 = scalar_lea.vmem %s6, 16
      %v1250 = vld [vmem:[%s1249] sm:$0xf]
      %v1252 = vsel %vm656, %v640, 0
      %v1255 = vsel %vm656, %v641, 0
      %v1258 = vsel %vm656, %v642, 0
      %v1261 = vsel %vm656, %v643, 0
      %v1264 = vsel %vm656, %v644, 0
      %v1267 = vsel %vm656, %v645, 0
      %v1270 = vsel %vm656, %v646, 0
      %v1273 = vsel %vm656, %v647, 0
      %v1276 = vsel %vm681, %v1250, 0
      %1278 = vmatprep.subr.mxu0 0.0
      %1279 = vmatpush1.msra.mxu0 %v1276
      %1280 = vmatprep.subr.mxu0 0.0
      %1281 = vmatpush1.msra.mxu0 0.0
      %1282 = vmatprep.subr.mxu0 0.0
      %1283 = vmatpush1.msra.mxu0 0.0
      %1284 = vmatprep.subr.mxu0 0.0
      %1285 = vmatpush1.msra.mxu0 0.0
      %1286 = vmatprep.subr.mxu0 0.0
      %1287 = vmatpush1.msra.mxu0 0.0
      %1288 = vmatprep.subr.mxu0 0.0
      %1289 = vmatpush1.msra.mxu0 0.0
      %1290 = vmatprep.subr.mxu0 0.0
      %1291 = vmatpush1.msra.mxu0 0.0
      %1292 = vmatprep.subr.mxu0 0.0
      %1293 = vmatpush1.msra.mxu0 0.0
      %1294 = vmatprep.subr.mxu0 0.0
      %1295 = vmatpush1.msra.mxu0 0.0
      %1296 = vmatprep.subr.mxu0 0.0
      %1297 = vmatpush1.msra.mxu0 0.0
      %1298 = vmatprep.subr.mxu0 0.0
      %1299 = vmatpush1.msra.mxu0 0.0
      %1300 = vmatprep.subr.mxu0 0.0
      %1301 = vmatpush1.msra.mxu0 0.0
      %1302 = vmatprep.subr.mxu0 0.0
      %1303 = vmatpush1.msra.mxu0 0.0
      %1304 = vmatprep.subr.mxu0 0.0
      %1305 = vmatpush1.msra.mxu0 0.0
      %1306 = vmatprep.subr.mxu0 0.0
      %1307 = vmatpush1.msra.mxu0 0.0
      %1308 = vmatprep.subr.mxu0 0.0
      %1309 = vmatpush1.msra.mxu0 0.0
      %1310 = vmatprep.subr.mxu0 0.0
      %1311 = vmatpush1.msra.mxu0 0.0
      %1312 = vmatprep.subr.mxu0 0.0
      %1313 = vmatpush1.msra.mxu0 0.0
      %1314 = vmatprep.subr.mxu0 0.0
      %1315 = vmatpush1.msra.mxu0 0.0
      %1316 = vmatprep.subr.mxu0 0.0
      %1317 = vmatpush1.msra.mxu0 0.0
      %1318 = vmatprep.subr.mxu0 0.0
      %1319 = vmatpush1.msra.mxu0 0.0
      %1320 = vmatprep.subr.mxu0 0.0
      %1321 = vmatpush1.msra.mxu0 0.0
      %1322 = vmatprep.subr.mxu0 0.0
      %1323 = vmatpush1.msra.mxu0 0.0
      %1324 = vmatprep.subr.mxu0 0.0
      %1325 = vmatpush1.msra.mxu0 0.0
      %1326 = vmatprep.subr.mxu0 0.0
      %1327 = vmatpush1.msra.mxu0 0.0
      %1328 = vmatprep.subr.mxu0 0.0
      %1329 = vmatpush1.msra.mxu0 0.0
      %1330 = vmatprep.subr.mxu0 0.0
      %1331 = vmatpush1.msra.mxu0 0.0
      %1332 = vmatprep.subr.mxu0 0.0
      %1333 = vmatpush1.msra.mxu0 0.0
      %1334 = vmatprep.subr.mxu0 0.0
      %1335 = vmatpush1.msra.mxu0 0.0
      %1336 = vmatprep.subr.mxu0 0.0
      %1337 = vmatpush1.msra.mxu0 0.0
      %1338 = vmatprep.subr.mxu0 0.0
      %1339 = vmatpush1.msra.mxu0 0.0
      %1340 = vmatprep.subr.mxu0 0.0
      %1341 = vmatpush1.msra.mxu0 0.0
      %1342 = vmatprep.mubr.f32.mxu0 0.0
      %1343 = vmatmul.mubr.f32.gmra.mrb[0].mxu0 %v1252
      %v1344 = vpop.f32.mrb[0].mxu0
      %v1345 = vadd.f32 0.0, %v1344
      %v1346 = vpop.f32.mrb[0].mxu0
      %1347 = vmatprep.mubr.f32.mxu0 0.0
      %1348 = vmatmul.mubr.f32.gmra.mrb[0].mxu0 %v1255
      %v1349 = vpop.f32.mrb[0].mxu0
      %v1350 = vadd.f32 0.0, %v1349
      %v1351 = vpop.f32.mrb[0].mxu0
      %1352 = vmatprep.mubr.f32.mxu0 0.0
      %1353 = vmatmul.mubr.f32.gmra.mrb[0].mxu0 %v1258
      %v1354 = vpop.f32.mrb[0].mxu0
      %v1355 = vadd.f32 0.0, %v1354
      %v1356 = vpop.f32.mrb[0].mxu0
      %1357 = vmatprep.mubr.f32.mxu0 0.0
      %1358 = vmatmul.mubr.f32.gmra.mrb[0].mxu0 %v1261
      %v1359 = vpop.f32.mrb[0].mxu0
      %v1360 = vadd.f32 0.0, %v1359
      %v1361 = vpop.f32.mrb[0].mxu0
      %1362 = vmatprep.mubr.f32.mxu0 0.0
      %1363 = vmatmul.mubr.f32.gmra.mrb[0].mxu0 %v1264
      %v1364 = vpop.f32.mrb[0].mxu0
      %v1365 = vadd.f32 0.0, %v1364
      %v1366 = vpop.f32.mrb[0].mxu0
      %1367 = vmatprep.mubr.f32.mxu0 0.0
      %1368 = vmatmul.mubr.f32.gmra.mrb[0].mxu0 %v1267
      %v1369 = vpop.f32.mrb[0].mxu0
      %v1370 = vadd.f32 0.0, %v1369
      %v1371 = vpop.f32.mrb[0].mxu0
      %1372 = vmatprep.mubr.f32.mxu0 0.0
      %1373 = vmatmul.mubr.f32.gmra.mrb[0].mxu0 %v1270
      %v1374 = vpop.f32.mrb[0].mxu0
      %v1375 = vadd.f32 0.0, %v1374
      %v1376 = vpop.f32.mrb[0].mxu0
      %1377 = vmatprep.mubr.f32.mxu0 0.0
      %1378 = vmatmul.mubr.f32.gmra.mrb[0].mxu0 %v1273
      %v1379 = vpop.f32.mrb[0].mxu0
      %v1380 = vadd.f32 0.0, %v1379
      %v1381 = vpop.f32.mrb[0].mxu0
      %1382 = vdwg.mxu0
      %v1383 = vadd.f32 %v1241, %v1345
      %v1384 = vadd.f32 %v1242, %v1350
      %v1385 = vadd.f32 %v1243, %v1355
      %v1386 = vadd.f32 %v1244, %v1360
      %v1387 = vadd.f32 %v1245, %v1365
      %v1388 = vadd.f32 %v1246, %v1370
      %v1389 = vadd.f32 %v1247, %v1375
      %v1390 = vadd.f32 %v1248, %v1380
      %v1399 = vrot.slane %v624, 1
      %v1400 = vrot.slane %v625, 1
      %v1401 = vsel %vm948, %v1399, %v1400
      %v1402 = vrot.slane %v626, 1
      %v1403 = vrot.slane %v627, 1
      %v1404 = vsel %vm948, %v1402, %v1403
      %v1405 = vrot.slane %v628, 1
      %v1406 = vrot.slane %v629, 1
      %v1407 = vsel %vm948, %v1405, %v1406
      %v1408 = vrot.slane %v630, 1
      %v1409 = vrot.slane %v631, 1
      %v1410 = vsel %vm948, %v1408, %v1409
      %v1411 = vrot.slane %v632, 1
      %v1412 = vrot.slane %v633, 1
      %v1413 = vsel %vm948, %v1411, %v1412
      %v1414 = vrot.slane %v634, 1
      %v1415 = vrot.slane %v635, 1
      %v1416 = vsel %vm948, %v1414, %v1415
      %v1417 = vrot.slane %v636, 1
      %v1418 = vrot.slane %v637, 1
      %v1419 = vsel %vm948, %v1417, %v1418
      %v1420 = vrot.slane %v638, 1
      %v1421 = vrot.slane %v639, 1
      %v1422 = vsel %vm948, %v1420, %v1421
      %s1423 = scalar_lea.vmem %s6, 20
      %v1424 = vld [vmem:[%s1423] sm:$0xf]
      %v1425 = vsel %vm656, %v1401, 0
      %v1427 = vsel %vm656, %v1404, 0
      %v1429 = vsel %vm656, %v1407, 0
      %v1431 = vsel %vm656, %v1410, 0
      %v1433 = vsel %vm656, %v1413, 0
      %v1435 = vsel %vm656, %v1416, 0
      %v1437 = vsel %vm656, %v1419, 0
      %v1439 = vsel %vm656, %v1422, 0
      %v1442 = vsel %vm681, %v1424, 0
      %1444 = vmatprep.subr.mxu0 0.0
      %1445 = vmatpush1.msra.mxu0 %v1442
      %1446 = vmatprep.subr.mxu0 0.0
      %1447 = vmatpush1.msra.mxu0 0.0
      %1448 = vmatprep.subr.mxu0 0.0
      %1449 = vmatpush1.msra.mxu0 0.0
      %1450 = vmatprep.subr.mxu0 0.0
      %1451 = vmatpush1.msra.mxu0 0.0
      %1452 = vmatprep.subr.mxu0 0.0
      %1453 = vmatpush1.msra.mxu0 0.0
      %1454 = vmatprep.subr.mxu0 0.0
      %1455 = vmatpush1.msra.mxu0 0.0
      %1456 = vmatprep.subr.mxu0 0.0
      %1457 = vmatpush1.msra.mxu0 0.0
      %1458 = vmatprep.subr.mxu0 0.0
      %1459 = vmatpush1.msra.mxu0 0.0
      %1460 = vmatprep.subr.mxu0 0.0
      %1461 = vmatpush1.msra.mxu0 0.0
      %1462 = vmatprep.subr.mxu0 0.0
      %1463 = vmatpush1.msra.mxu0 0.0
      %1464 = vmatprep.subr.mxu0 0.0
      %1465 = vmatpush1.msra.mxu0 0.0
      %1466 = vmatprep.subr.mxu0 0.0
      %1467 = vmatpush1.msra.mxu0 0.0
      %1468 = vmatprep.subr.mxu0 0.0
      %1469 = vmatpush1.msra.mxu0 0.0
      %1470 = vmatprep.subr.mxu0 0.0
      %1471 = vmatpush1.msra.mxu0 0.0
      %1472 = vmatprep.subr.mxu0 0.0
      %1473 = vmatpush1.msra.mxu0 0.0
      %1474 = vmatprep.subr.mxu0 0.0
      %1475 = vmatpush1.msra.mxu0 0.0
      %1476 = vmatprep.subr.mxu0 0.0
      %1477 = vmatpush1.msra.mxu0 0.0
      %1478 = vmatprep.subr.mxu0 0.0
      %1479 = vmatpush1.msra.mxu0 0.0
      %1480 = vmatprep.subr.mxu0 0.0
      %1481 = vmatpush1.msra.mxu0 0.0
      %1482 = vmatprep.subr.mxu0 0.0
      %1483 = vmatpush1.msra.mxu0 0.0
      %1484 = vmatprep.subr.mxu0 0.0
      %1485 = vmatpush1.msra.mxu0 0.0
      %1486 = vmatprep.subr.mxu0 0.0
      %1487 = vmatpush1.msra.mxu0 0.0
      %1488 = vmatprep.subr.mxu0 0.0
      %1489 = vmatpush1.msra.mxu0 0.0
      %1490 = vmatprep.subr.mxu0 0.0
      %1491 = vmatpush1.msra.mxu0 0.0
      %1492 = vmatprep.subr.mxu0 0.0
      %1493 = vmatpush1.msra.mxu0 0.0
      %1494 = vmatprep.subr.mxu0 0.0
      %1495 = vmatpush1.msra.mxu0 0.0
      %1496 = vmatprep.subr.mxu0 0.0
      %1497 = vmatpush1.msra.mxu0 0.0
      %1498 = vmatprep.subr.mxu0 0.0
      %1499 = vmatpush1.msra.mxu0 0.0
      %1500 = vmatprep.subr.mxu0 0.0
      %1501 = vmatpush1.msra.mxu0 0.0
      %1502 = vmatprep.subr.mxu0 0.0
      %1503 = vmatpush1.msra.mxu0 0.0
      %1504 = vmatprep.subr.mxu0 0.0
      %1505 = vmatpush1.msra.mxu0 0.0
      %1506 = vmatprep.subr.mxu0 0.0
      %1507 = vmatpush1.msra.mxu0 0.0
      %1508 = vmatprep.mubr.f32.mxu0 0.0
      %1509 = vmatmul.mubr.f32.gmra.mrb[0].mxu0 %v1425
      %v1510 = vpop.f32.mrb[0].mxu0
      %v1511 = vadd.f32 0.0, %v1510
      %v1512 = vpop.f32.mrb[0].mxu0
      %1513 = vmatprep.mubr.f32.mxu0 0.0
      %1514 = vmatmul.mubr.f32.gmra.mrb[0].mxu0 %v1427
      %v1515 = vpop.f32.mrb[0].mxu0
      %v1516 = vadd.f32 0.0, %v1515
      %v1517 = vpop.f32.mrb[0].mxu0
      %1518 = vmatprep.mubr.f32.mxu0 0.0
      %1519 = vmatmul.mubr.f32.gmra.mrb[0].mxu0 %v1429
      %v1520 = vpop.f32.mrb[0].mxu0
      %v1521 = vadd.f32 0.0, %v1520
      %v1522 = vpop.f32.mrb[0].mxu0
      %1523 = vmatprep.mubr.f32.mxu0 0.0
      %1524 = vmatmul.mubr.f32.gmra.mrb[0].mxu0 %v1431
      %v1525 = vpop.f32.mrb[0].mxu0
      %v1526 = vadd.f32 0.0, %v1525
      %v1527 = vpop.f32.mrb[0].mxu0
      %1528 = vmatprep.mubr.f32.mxu0 0.0
      %1529 = vmatmul.mubr.f32.gmra.mrb[0].mxu0 %v1433
      %v1530 = vpop.f32.mrb[0].mxu0
      %v1531 = vadd.f32 0.0, %v1530
      %v1532 = vpop.f32.mrb[0].mxu0
      %1533 = vmatprep.mubr.f32.mxu0 0.0
      %1534 = vmatmul.mubr.f32.gmra.mrb[0].mxu0 %v1435
      %v1535 = vpop.f32.mrb[0].mxu0
      %v1536 = vadd.f32 0.0, %v1535
      %v1537 = vpop.f32.mrb[0].mxu0
      %1538 = vmatprep.mubr.f32.mxu0 0.0
      %1539 = vmatmul.mubr.f32.gmra.mrb[0].mxu0 %v1437
      %v1540 = vpop.f32.mrb[0].mxu0
      %v1541 = vadd.f32 0.0, %v1540
      %v1542 = vpop.f32.mrb[0].mxu0
      %1543 = vmatprep.mubr.f32.mxu0 0.0
      %1544 = vmatmul.mubr.f32.gmra.mrb[0].mxu0 %v1439
      %v1545 = vpop.f32.mrb[0].mxu0
      %v1546 = vadd.f32 0.0, %v1545
      %v1547 = vpop.f32.mrb[0].mxu0
      %1548 = vdwg.mxu0
      %v1549 = vadd.f32 %v1383, %v1511
      %v1550 = vadd.f32 %v1384, %v1516
      %v1551 = vadd.f32 %v1385, %v1521
      %v1552 = vadd.f32 %v1386, %v1526
      %v1553 = vadd.f32 %v1387, %v1531
      %v1554 = vadd.f32 %v1388, %v1536
      %v1555 = vadd.f32 %v1389, %v1541
      %v1556 = vadd.f32 %v1390, %v1546
      %s1557 = scalar_lea.vmem %s6, 24
      %v1558 = vld [vmem:[%s1557] sm:$0xf]
      %v1560 = vsel %vm656, %v613, 0
      %v1563 = vsel %vm681, %v1558, 0
      %1565 = vmatprep.subr.mxu0 0.0
      %1566 = vmatpush1.msra.mxu0 %v1563
      %1567 = vmatprep.subr.mxu0 0.0
      %1568 = vmatpush1.msra.mxu0 0.0
      %1569 = vmatprep.subr.mxu0 0.0
      %1570 = vmatpush1.msra.mxu0 0.0
      %1571 = vmatprep.subr.mxu0 0.0
      %1572 = vmatpush1.msra.mxu0 0.0
      %1573 = vmatprep.subr.mxu0 0.0
      %1574 = vmatpush1.msra.mxu0 0.0
      %1575 = vmatprep.subr.mxu0 0.0
      %1576 = vmatpush1.msra.mxu0 0.0
      %1577 = vmatprep.subr.mxu0 0.0
      %1578 = vmatpush1.msra.mxu0 0.0
      %1579 = vmatprep.subr.mxu0 0.0
      %1580 = vmatpush1.msra.mxu0 0.0
      %1581 = vmatprep.subr.mxu0 0.0
      %1582 = vmatpush1.msra.mxu0 0.0
      %1583 = vmatprep.subr.mxu0 0.0
      %1584 = vmatpush1.msra.mxu0 0.0
      %1585 = vmatprep.subr.mxu0 0.0
      %1586 = vmatpush1.msra.mxu0 0.0
      %1587 = vmatprep.subr.mxu0 0.0
      %1588 = vmatpush1.msra.mxu0 0.0
      %1589 = vmatprep.subr.mxu0 0.0
      %1590 = vmatpush1.msra.mxu0 0.0
      %1591 = vmatprep.subr.mxu0 0.0
      %1592 = vmatpush1.msra.mxu0 0.0
      %1593 = vmatprep.subr.mxu0 0.0
      %1594 = vmatpush1.msra.mxu0 0.0
      %1595 = vmatprep.subr.mxu0 0.0
      %1596 = vmatpush1.msra.mxu0 0.0
      %1597 = vmatprep.subr.mxu0 0.0
      %1598 = vmatpush1.msra.mxu0 0.0
      %1599 = vmatprep.subr.mxu0 0.0
      %1600 = vmatpush1.msra.mxu0 0.0
      %1601 = vmatprep.subr.mxu0 0.0
      %1602 = vmatpush1.msra.mxu0 0.0
      %1603 = vmatprep.subr.mxu0 0.0
      %1604 = vmatpush1.msra.mxu0 0.0
      %1605 = vmatprep.subr.mxu0 0.0
      %1606 = vmatpush1.msra.mxu0 0.0
      %1607 = vmatprep.subr.mxu0 0.0
      %1608 = vmatpush1.msra.mxu0 0.0
      %1609 = vmatprep.subr.mxu0 0.0
      %1610 = vmatpush1.msra.mxu0 0.0
      %1611 = vmatprep.subr.mxu0 0.0
      %1612 = vmatpush1.msra.mxu0 0.0
      %1613 = vmatprep.subr.mxu0 0.0
      %1614 = vmatpush1.msra.mxu0 0.0
      %1615 = vmatprep.subr.mxu0 0.0
      %1616 = vmatpush1.msra.mxu0 0.0
      %1617 = vmatprep.subr.mxu0 0.0
      %1618 = vmatpush1.msra.mxu0 0.0
      %1619 = vmatprep.subr.mxu0 0.0
      %1620 = vmatpush1.msra.mxu0 0.0
      %1621 = vmatprep.subr.mxu0 0.0
      %1622 = vmatpush1.msra.mxu0 0.0
      %1623 = vmatprep.subr.mxu0 0.0
      %1624 = vmatpush1.msra.mxu0 0.0
      %1625 = vmatprep.subr.mxu0 0.0
      %1626 = vmatpush1.msra.mxu0 0.0
      %1627 = vmatprep.subr.mxu0 0.0
      %1628 = vmatpush1.msra.mxu0 0.0
      %1629 = vmatprep.mubr.f32.mxu0 0.0
      %1630 = vmatmul.mubr.f32.gmra.mrb[0].mxu0 %v661
      %v1631 = vpop.f32.mrb[0].mxu0
      %v1632 = vadd.f32 0.0, %v1631
      %v1633 = vpop.f32.mrb[0].mxu0
      %1634 = vmatprep.mubr.f32.mxu0 0.0
      %1635 = vmatmul.mubr.f32.gmra.mrb[0].mxu0 %v664
      %v1636 = vpop.f32.mrb[0].mxu0
      %v1637 = vadd.f32 0.0, %v1636
      %v1638 = vpop.f32.mrb[0].mxu0
      %1639 = vmatprep.mubr.f32.mxu0 0.0
      %1640 = vmatmul.mubr.f32.gmra.mrb[0].mxu0 %v667
      %v1641 = vpop.f32.mrb[0].mxu0
      %v1642 = vadd.f32 0.0, %v1641
      %v1643 = vpop.f32.mrb[0].mxu0
      %1644 = vmatprep.mubr.f32.mxu0 0.0
      %1645 = vmatmul.mubr.f32.gmra.mrb[0].mxu0 %v670
      %v1646 = vpop.f32.mrb[0].mxu0
      %v1647 = vadd.f32 0.0, %v1646
      %v1648 = vpop.f32.mrb[0].mxu0
      %1649 = vmatprep.mubr.f32.mxu0 0.0
      %1650 = vmatmul.mubr.f32.gmra.mrb[0].mxu0 %v673
      %v1651 = vpop.f32.mrb[0].mxu0
      %v1652 = vadd.f32 0.0, %v1651
      %v1653 = vpop.f32.mrb[0].mxu0
      %1654 = vmatprep.mubr.f32.mxu0 0.0
      %1655 = vmatmul.mubr.f32.gmra.mrb[0].mxu0 %v676
      %v1656 = vpop.f32.mrb[0].mxu0
      %v1657 = vadd.f32 0.0, %v1656
      %v1658 = vpop.f32.mrb[0].mxu0
      %1659 = vmatprep.mubr.f32.mxu0 0.0
      %1660 = vmatmul.mubr.f32.gmra.mrb[0].mxu0 %v679
      %v1661 = vpop.f32.mrb[0].mxu0
      %v1662 = vadd.f32 0.0, %v1661
      %v1663 = vpop.f32.mrb[0].mxu0
      %1664 = vmatprep.mubr.f32.mxu0 0.0
      %1665 = vmatmul.mubr.f32.gmra.mrb[0].mxu0 %v1560
      %v1666 = vpop.f32.mrb[0].mxu0
      %v1667 = vadd.f32 0.0, %v1666
      %v1668 = vpop.f32.mrb[0].mxu0
      %1669 = vdwg.mxu0
      %v1670 = vadd.f32 %v1549, %v1632
      %v1671 = vadd.f32 %v1550, %v1637
      %v1672 = vadd.f32 %v1551, %v1642
      %v1673 = vadd.f32 %v1552, %v1647
      %v1674 = vadd.f32 %v1553, %v1652
      %v1675 = vadd.f32 %v1554, %v1657
      %v1676 = vadd.f32 %v1555, %v1662
      %v1677 = vadd.f32 %v1556, %v1667
      %s1678 = scalar_lea.vmem %s6, 28
      %v1679 = vld [vmem:[%s1678] sm:$0xf]
      %v1681 = vsel %vm656, %v623, 0
      %v1684 = vsel %vm681, %v1679, 0
      %1686 = vmatprep.subr.mxu0 0.0
      %1687 = vmatpush1.msra.mxu0 %v1684
      %1688 = vmatprep.subr.mxu0 0.0
      %1689 = vmatpush1.msra.mxu0 0.0
      %1690 = vmatprep.subr.mxu0 0.0
      %1691 = vmatpush1.msra.mxu0 0.0
      %1692 = vmatprep.subr.mxu0 0.0
      %1693 = vmatpush1.msra.mxu0 0.0
      %1694 = vmatprep.subr.mxu0 0.0
      %1695 = vmatpush1.msra.mxu0 0.0
      %1696 = vmatprep.subr.mxu0 0.0
      %1697 = vmatpush1.msra.mxu0 0.0
      %1698 = vmatprep.subr.mxu0 0.0
      %1699 = vmatpush1.msra.mxu0 0.0
      %1700 = vmatprep.subr.mxu0 0.0
      %1701 = vmatpush1.msra.mxu0 0.0
      %1702 = vmatprep.subr.mxu0 0.0
      %1703 = vmatpush1.msra.mxu0 0.0
      %1704 = vmatprep.subr.mxu0 0.0
      %1705 = vmatpush1.msra.mxu0 0.0
      %1706 = vmatprep.subr.mxu0 0.0
      %1707 = vmatpush1.msra.mxu0 0.0
      %1708 = vmatprep.subr.mxu0 0.0
      %1709 = vmatpush1.msra.mxu0 0.0
      %1710 = vmatprep.subr.mxu0 0.0
      %1711 = vmatpush1.msra.mxu0 0.0
      %1712 = vmatprep.subr.mxu0 0.0
      %1713 = vmatpush1.msra.mxu0 0.0
      %1714 = vmatprep.subr.mxu0 0.0
      %1715 = vmatpush1.msra.mxu0 0.0
      %1716 = vmatprep.subr.mxu0 0.0
      %1717 = vmatpush1.msra.mxu0 0.0
      %1718 = vmatprep.subr.mxu0 0.0
      %1719 = vmatpush1.msra.mxu0 0.0
      %1720 = vmatprep.subr.mxu0 0.0
      %1721 = vmatpush1.msra.mxu0 0.0
      %1722 = vmatprep.subr.mxu0 0.0
      %1723 = vmatpush1.msra.mxu0 0.0
      %1724 = vmatprep.subr.mxu0 0.0
      %1725 = vmatpush1.msra.mxu0 0.0
      %1726 = vmatprep.subr.mxu0 0.0
      %1727 = vmatpush1.msra.mxu0 0.0
      %1728 = vmatprep.subr.mxu0 0.0
      %1729 = vmatpush1.msra.mxu0 0.0
      %1730 = vmatprep.subr.mxu0 0.0
      %1731 = vmatpush1.msra.mxu0 0.0
      %1732 = vmatprep.subr.mxu0 0.0
      %1733 = vmatpush1.msra.mxu0 0.0
      %1734 = vmatprep.subr.mxu0 0.0
      %1735 = vmatpush1.msra.mxu0 0.0
      %1736 = vmatprep.subr.mxu0 0.0
      %1737 = vmatpush1.msra.mxu0 0.0
      %1738 = vmatprep.subr.mxu0 0.0
      %1739 = vmatpush1.msra.mxu0 0.0
      %1740 = vmatprep.subr.mxu0 0.0
      %1741 = vmatpush1.msra.mxu0 0.0
      %1742 = vmatprep.subr.mxu0 0.0
      %1743 = vmatpush1.msra.mxu0 0.0
      %1744 = vmatprep.subr.mxu0 0.0
      %1745 = vmatpush1.msra.mxu0 0.0
      %1746 = vmatprep.subr.mxu0 0.0
      %1747 = vmatpush1.msra.mxu0 0.0
      %1748 = vmatprep.subr.mxu0 0.0
      %1749 = vmatpush1.msra.mxu0 0.0
      %1750 = vmatprep.mubr.f32.mxu0 0.0
      %1751 = vmatmul.mubr.f32.gmra.mrb[0].mxu0 %v804
      %v1752 = vpop.f32.mrb[0].mxu0
      %v1753 = vadd.f32 0.0, %v1752
      %v1754 = vpop.f32.mrb[0].mxu0
      %1755 = vmatprep.mubr.f32.mxu0 0.0
      %1756 = vmatmul.mubr.f32.gmra.mrb[0].mxu0 %v807
      %v1757 = vpop.f32.mrb[0].mxu0
      %v1758 = vadd.f32 0.0, %v1757
      %v1759 = vpop.f32.mrb[0].mxu0
      %1760 = vmatprep.mubr.f32.mxu0 0.0
      %1761 = vmatmul.mubr.f32.gmra.mrb[0].mxu0 %v810
      %v1762 = vpop.f32.mrb[0].mxu0
      %v1763 = vadd.f32 0.0, %v1762
      %v1764 = vpop.f32.mrb[0].mxu0
      %1765 = vmatprep.mubr.f32.mxu0 0.0
      %1766 = vmatmul.mubr.f32.gmra.mrb[0].mxu0 %v813
      %v1767 = vpop.f32.mrb[0].mxu0
      %v1768 = vadd.f32 0.0, %v1767
      %v1769 = vpop.f32.mrb[0].mxu0
      %1770 = vmatprep.mubr.f32.mxu0 0.0
      %1771 = vmatmul.mubr.f32.gmra.mrb[0].mxu0 %v816
      %v1772 = vpop.f32.mrb[0].mxu0
      %v1773 = vadd.f32 0.0, %v1772
      %v1774 = vpop.f32.mrb[0].mxu0
      %1775 = vmatprep.mubr.f32.mxu0 0.0
      %1776 = vmatmul.mubr.f32.gmra.mrb[0].mxu0 %v819
      %v1777 = vpop.f32.mrb[0].mxu0
      %v1778 = vadd.f32 0.0, %v1777
      %v1779 = vpop.f32.mrb[0].mxu0
      %1780 = vmatprep.mubr.f32.mxu0 0.0
      %1781 = vmatmul.mubr.f32.gmra.mrb[0].mxu0 %v822
      %v1782 = vpop.f32.mrb[0].mxu0
      %v1783 = vadd.f32 0.0, %v1782
      %v1784 = vpop.f32.mrb[0].mxu0
      %1785 = vmatprep.mubr.f32.mxu0 0.0
      %1786 = vmatmul.mubr.f32.gmra.mrb[0].mxu0 %v1681
      %v1787 = vpop.f32.mrb[0].mxu0
      %v1788 = vadd.f32 0.0, %v1787
      %v1789 = vpop.f32.mrb[0].mxu0
      %1790 = vdwg.mxu0
      %v1791 = vadd.f32 %v1670, %v1753
      %v1792 = vadd.f32 %v1671, %v1758
      %v1793 = vadd.f32 %v1672, %v1763
      %v1794 = vadd.f32 %v1673, %v1768
      %v1795 = vadd.f32 %v1674, %v1773
      %v1796 = vadd.f32 %v1675, %v1778
      %v1797 = vadd.f32 %v1676, %v1783
      %v1798 = vadd.f32 %v1677, %v1788
      %v1800 = vrot.slane %v613, 1
      %v1801 = vrot.slane %v614, 1
      %v1802 = vsel %vm948, %v1800, %v1801
      %s1803 = scalar_lea.vmem %s6, 32
      %v1804 = vld [vmem:[%s1803] sm:$0xf]
      %v1805 = vsel %vm656, %v1802, 0
      %v1808 = vsel %vm681, %v1804, 0
      %1810 = vmatprep.subr.mxu0 0.0
      %1811 = vmatpush1.msra.mxu0 %v1808
      %1812 = vmatprep.subr.mxu0 0.0
      %1813 = vmatpush1.msra.mxu0 0.0
      %1814 = vmatprep.subr.mxu0 0.0
      %1815 = vmatpush1.msra.mxu0 0.0
      %1816 = vmatprep.subr.mxu0 0.0
      %1817 = vmatpush1.msra.mxu0 0.0
      %1818 = vmatprep.subr.mxu0 0.0
      %1819 = vmatpush1.msra.mxu0 0.0
      %1820 = vmatprep.subr.mxu0 0.0
      %1821 = vmatpush1.msra.mxu0 0.0
      %1822 = vmatprep.subr.mxu0 0.0
      %1823 = vmatpush1.msra.mxu0 0.0
      %1824 = vmatprep.subr.mxu0 0.0
      %1825 = vmatpush1.msra.mxu0 0.0
      %1826 = vmatprep.subr.mxu0 0.0
      %1827 = vmatpush1.msra.mxu0 0.0
      %1828 = vmatprep.subr.mxu0 0.0
      %1829 = vmatpush1.msra.mxu0 0.0
      %1830 = vmatprep.subr.mxu0 0.0
      %1831 = vmatpush1.msra.mxu0 0.0
      %1832 = vmatprep.subr.mxu0 0.0
      %1833 = vmatpush1.msra.mxu0 0.0
      %1834 = vmatprep.subr.mxu0 0.0
      %1835 = vmatpush1.msra.mxu0 0.0
      %1836 = vmatprep.subr.mxu0 0.0
      %1837 = vmatpush1.msra.mxu0 0.0
      %1838 = vmatprep.subr.mxu0 0.0
      %1839 = vmatpush1.msra.mxu0 0.0
      %1840 = vmatprep.subr.mxu0 0.0
      %1841 = vmatpush1.msra.mxu0 0.0
      %1842 = vmatprep.subr.mxu0 0.0
      %1843 = vmatpush1.msra.mxu0 0.0
      %1844 = vmatprep.subr.mxu0 0.0
      %1845 = vmatpush1.msra.mxu0 0.0
      %1846 = vmatprep.subr.mxu0 0.0
      %1847 = vmatpush1.msra.mxu0 0.0
      %1848 = vmatprep.subr.mxu0 0.0
      %1849 = vmatpush1.msra.mxu0 0.0
      %1850 = vmatprep.subr.mxu0 0.0
      %1851 = vmatpush1.msra.mxu0 0.0
      %1852 = vmatprep.subr.mxu0 0.0
      %1853 = vmatpush1.msra.mxu0 0.0
      %1854 = vmatprep.subr.mxu0 0.0
      %1855 = vmatpush1.msra.mxu0 0.0
      %1856 = vmatprep.subr.mxu0 0.0
      %1857 = vmatpush1.msra.mxu0 0.0
      %1858 = vmatprep.subr.mxu0 0.0
      %1859 = vmatpush1.msra.mxu0 0.0
      %1860 = vmatprep.subr.mxu0 0.0
      %1861 = vmatpush1.msra.mxu0 0.0
      %1862 = vmatprep.subr.mxu0 0.0
      %1863 = vmatpush1.msra.mxu0 0.0
      %1864 = vmatprep.subr.mxu0 0.0
      %1865 = vmatpush1.msra.mxu0 0.0
      %1866 = vmatprep.subr.mxu0 0.0
      %1867 = vmatpush1.msra.mxu0 0.0
      %1868 = vmatprep.subr.mxu0 0.0
      %1869 = vmatpush1.msra.mxu0 0.0
      %1870 = vmatprep.subr.mxu0 0.0
      %1871 = vmatpush1.msra.mxu0 0.0
      %1872 = vmatprep.subr.mxu0 0.0
      %1873 = vmatpush1.msra.mxu0 0.0
      %1874 = vmatprep.mubr.f32.mxu0 0.0
      %1875 = vmatmul.mubr.f32.gmra.mrb[0].mxu0 %v977
      %v1876 = vpop.f32.mrb[0].mxu0
      %v1877 = vadd.f32 0.0, %v1876
      %v1878 = vpop.f32.mrb[0].mxu0
      %1879 = vmatprep.mubr.f32.mxu0 0.0
      %1880 = vmatmul.mubr.f32.gmra.mrb[0].mxu0 %v979
      %v1881 = vpop.f32.mrb[0].mxu0
      %v1882 = vadd.f32 0.0, %v1881
      %v1883 = vpop.f32.mrb[0].mxu0
      %1884 = vmatprep.mubr.f32.mxu0 0.0
      %1885 = vmatmul.mubr.f32.gmra.mrb[0].mxu0 %v981
      %v1886 = vpop.f32.mrb[0].mxu0
      %v1887 = vadd.f32 0.0, %v1886
      %v1888 = vpop.f32.mrb[0].mxu0
      %1889 = vmatprep.mubr.f32.mxu0 0.0
      %1890 = vmatmul.mubr.f32.gmra.mrb[0].mxu0 %v983
      %v1891 = vpop.f32.mrb[0].mxu0
      %v1892 = vadd.f32 0.0, %v1891
      %v1893 = vpop.f32.mrb[0].mxu0
      %1894 = vmatprep.mubr.f32.mxu0 0.0
      %1895 = vmatmul.mubr.f32.gmra.mrb[0].mxu0 %v985
      %v1896 = vpop.f32.mrb[0].mxu0
      %v1897 = vadd.f32 0.0, %v1896
      %v1898 = vpop.f32.mrb[0].mxu0
      %1899 = vmatprep.mubr.f32.mxu0 0.0
      %1900 = vmatmul.mubr.f32.gmra.mrb[0].mxu0 %v987
      %v1901 = vpop.f32.mrb[0].mxu0
      %v1902 = vadd.f32 0.0, %v1901
      %v1903 = vpop.f32.mrb[0].mxu0
      %1904 = vmatprep.mubr.f32.mxu0 0.0
      %1905 = vmatmul.mubr.f32.gmra.mrb[0].mxu0 %v989
      %v1906 = vpop.f32.mrb[0].mxu0
      %v1907 = vadd.f32 0.0, %v1906
      %v1908 = vpop.f32.mrb[0].mxu0
      %1909 = vmatprep.mubr.f32.mxu0 0.0
      %1910 = vmatmul.mubr.f32.gmra.mrb[0].mxu0 %v1805
      %v1911 = vpop.f32.mrb[0].mxu0
      %v1912 = vadd.f32 0.0, %v1911
      %v1913 = vpop.f32.mrb[0].mxu0
      %1914 = vdwg.mxu0
      %v1915 = vadd.f32 %v1791, %v1877
      %v1916 = vadd.f32 %v1792, %v1882
      %v1917 = vadd.f32 %v1793, %v1887
      %v1918 = vadd.f32 %v1794, %v1892
      %v1919 = vadd.f32 %v1795, %v1897
      %v1920 = vadd.f32 %v1796, %v1902
      %v1921 = vadd.f32 %v1797, %v1907
      %v1922 = vadd.f32 %v1798, %v1912
      %1923 = vst.msk [vmem:[%s595] sm:$0xff] %vm656, %v1915
      %1924 = vst.msk [vmem:[%s595 + $0x8] sm:$0xff] %vm656, %v1916
      %1925 = vst.msk [vmem:[%s595 + $0x10] sm:$0xff] %vm656, %v1917
      %1926 = vst.msk [vmem:[%s595 + $0x18] sm:$0xff] %vm656, %v1918
      %1927 = vst.msk [vmem:[%s595 + $0x20] sm:$0xff] %vm656, %v1919
      %1928 = vst.msk [vmem:[%s595 + $0x28] sm:$0xff] %vm656, %v1920
      %1929 = vst.msk [vmem:[%s595 + $0x30] sm:$0xff] %vm656, %v1921
      %1930 = vst.msk [vmem:[%s595 + $0x38] sm:$0xff] %vm656, %v1922
      %s1931 = smul.u32 8, %s24
      %p1932 = scmp.lt.s32.totalorder %s23, 1
      %s1933 = scalar_select %p1932, %s23, 1
      %p1934 = scmp.lt.s32.totalorder %s1931, 7
      %s1935 = scalar_select %p1934, %s1931, 7
      %s1936 = smul.addr %s1933, 8
      %s1937 = sadd.s32 %s1935, %s1936
      %s1938 = smul.addr %s1937, 8
      %s1939 = scalar_lea.vmem %s8, %s1938
      // Predicated region
      $region53: #{tpu_custom_call.1} parent=51 // pred_check
        %p1940 = pneg %p269
      $region54: #{tpu_custom_call.1} parent=51 // pred_check_branch
        %1942 = sbr.rel (%p1940) target = $region56
      $region55: #{tpu_custom_call.1} parent=51 // pred_region
        %s1943 = smul.u32 8, %s24
      $region56: #{tpu_custom_call.1} parent=51 // pred_fallthru
        _
    $region52: #{tpu_custom_call.1} parent=5 // pred_fallthru
      _
    %p1944 = scmp.le.s32.totalorder 2, %s14
    // Predicated region
    $region57: #{tpu_custom_call.1} parent=5 // pred_check
      %p1945 = pneg %p1944
    $region58: #{tpu_custom_call.1} parent=5 // pred_check_branch
      %1947 = sbr.rel (%p1945) target = $region60
    $region59: #{tpu_custom_call.1} parent=5 // pred_region
      %s1948 = ssub.s32 %s14, 2
      // Predicated region
      $region61: #{tpu_custom_call.1} parent=59 // pred_check
        %p1949 = pneg %p275
      $region62: #{tpu_custom_call.1} parent=59 // pred_check_branch
        %1951 = sbr.rel (%p1949) target = $region64
      $region63: #{tpu_custom_call.1} parent=59 // pred_region
        %s1952 = smul.u32 8, %s26
        %p1953 = scmp.lt.s32.totalorder %s25, 1
        %s1954 = scalar_select %p1953, %s25, 1
        %p1955 = scmp.lt.s32.totalorder %s1952, 7
        %s1956 = scalar_select %p1955, %s1952, 7
        %s1957 = smul.addr %s1954, 8
        %s1958 = sadd.s32 %s1956, %s1957
        %s1959 = smul.addr %s1958, 8
        %s1960 = scalar_lea.vmem %s8, %s1959
      $region64: #{tpu_custom_call.1} parent=59 // pred_fallthru
        _
    $region60: #{tpu_custom_call.1} parent=5 // pred_fallthru
      _
  $region6: #{tpu_custom_call.1} parent=0 // loop_footer
    %s18 = sadd.s32 1, %s14
  $region7: #{tpu_custom_call.1} parent=0 // loop_footer_branch
    %13 = sbr.rel target = $region3
  $region8: #{tpu_custom_call.1} parent=0 // loop_exit
    _

</llo_original>
